<compile_context>
chip_gen: v7x
topology: tpu7x:2x2x1
jax: 0.10.0
libtpu: 0.0.40
codegen_flags: <defaults>
</compile_context>

<pallas_src>
import functools

import jax
import jax.numpy as jnp
from jax.experimental import pallas as pl
from jax.experimental.pallas import tpu as pltpu


_LANE = 128
_GROUP_CAP = 32                              # max source rows folded into lanes
_DEFAULT_VMEM_CAPACITY = 64 * 1024 * 1024    # conservative fallback (v7x-sized)


def _round_up(x, m):
    return ((x + m - 1) // m) * m


def _vmem_capacity_bytes():
    """Generation-aware VMEM size (128 MiB on v5e/v6e, 64 MiB on v7x)."""
    try:
        cap = int(pltpu.get_tpu_info().vmem_capacity_bytes)
        if cap > 0:
            return cap
    except Exception:
        pass
    return _DEFAULT_VMEM_CAPACITY


def _pick_group(total_rows, w):
    """Smallest divisor g of total_rows with g*w >= 128 lanes (capped)."""
    target = -(-_LANE // w)                  # ceil(128 / w)
    best = 1
    for g in range(1, min(_GROUP_CAP, total_rows) + 1):
        if total_rows % g:
            continue
        best = g
        if g >= target:
            return g                         # lane-dense: g*w >= 128
    return best                              # no adequate divisor; best effort


def _pick_block_rows(num_rows, in_lanes, out_lanes, w, scale, itemsize, budget):
    """Rows of the folded (num_rows, in_lanes) input matrix per grid block."""
    sub = max(8, 32 // itemsize)             # dtype-aware sublane multiple
    # Padded VMEM bytes per folded input row: lane padding to 128, double
    # buffering for both tiles, plus the kernel temporaries (the loaded row
    # slice and the W-replicated slab).
    in_row = _round_up(in_lanes, _LANE) * itemsize
    out_row = _round_up(out_lanes, _LANE) * itemsize
    tmp_row = in_row + 2 * _round_up(w * scale, _LANE) * itemsize
    per_row = 2 * in_row + 2 * out_row + tmp_row
    rows = max(1, int(budget) // per_row)
    if rows >= num_rows:
        rows = num_rows
        if num_rows >= 2 * sub:
            # Megacore (v7x): keep at least 2 blocks so both TCs get work.
            rows = _round_up(-(-num_rows // 2), sub)
    else:
        rows = max(sub, (rows // sub) * sub)
    return int(min(rows, num_rows))


def _upsample_kernel(x_ref, o_ref, *, scale, group, width):
    """Nearest-neighbour upsample of one block.

    x_ref: (rows, group*W)           lanes = (r, w) for r in [0, group)
    o_ref: (rows, group*s*W*s)       lanes = (r, i, w, j), o = x[..., r, w]
    """
    s, g, w = scale, group, width
    ws = w * s
    for r in range(g):                       # static unroll, g <= 32
        # W replication: lane-interleaved repeat of one source row slab.
        xw = jnp.repeat(x_ref[:, r * w:(r + 1) * w], s, axis=1)   # (rows, W*s)
        # H replication (folded into the lane axis): s wide slab stores.
        for q in range(s):
            off = (r * s + q) * ws
            o_ref[:, off:off + ws] = xw


@functools.lru_cache(maxsize=None)
def _build_upsample(shape, dtype_name, scale):
    n, c, h, w = shape
    s = scale
    dtype = jnp.dtype(dtype_name)
    itemsize = dtype.itemsize

    total_rows = n * c * h                   # flattened (N, C, H) row space
    g = _pick_group(total_rows, w)
    rg = total_rows // g                     # rows of the folded matrix
    in_lanes = g * w
    out_lanes = g * s * w * s

    cap = _vmem_capacity_bytes()
    budget = int(cap * 0.45)                 # double-buffered in+out+temps
    vmem_limit = int(cap * 0.75)

    block_rows = _pick_block_rows(rg, in_lanes, out_lanes, w, s, itemsize,
                                  budget)
    grid = (pl.cdiv(rg, block_rows),)

    kernel = functools.partial(_upsample_kernel, scale=s, group=g, width=w)
    call = pl.pallas_call(
        kernel,
        out_shape=jax.ShapeDtypeStruct((rg, out_lanes), dtype),
        grid=grid,
        in_specs=[pl.BlockSpec((block_rows, in_lanes), lambda i: (i, 0))],
        out_specs=pl.BlockSpec((block_rows, out_lanes), lambda i: (i, 0)),
        compiler_params=pltpu.CompilerParams(
            dimension_semantics=("parallel",),
            vmem_limit_bytes=vmem_limit),
    )

    def run(x):
        # Both reshapes are contiguity-preserving (row-major) => free.
        y = call(x.reshape(rg, in_lanes))
        return y.reshape(n, c, h * s, w * s)

    return jax.jit(run)


def interpolate_nearest(x, scale_factor):
    """Equivalent of F.interpolate(x, scale_factor=s, mode='nearest'), NCHW."""
    s = int(scale_factor)
    if s != scale_factor or s < 1:
        raise ValueError("only positive integer scale_factor is supported")
    if x.ndim != 4:
        raise ValueError("expected a 4-D NCHW input")
    if s == 1:
        return x
    shape = tuple(int(d) for d in x.shape)
    return _build_upsample(shape, str(x.dtype), s)(x)


class Interpolate:
    """JAX/Pallas port of the PyTorch Interpolate module (nearest mode)."""

    def __init__(self, scale_factor, mode="nearest"):
        if mode != "nearest":
            raise NotImplementedError("only mode='nearest' is implemented")
        self.scale_factor = scale_factor
        self.mode = mode

    def __call__(self, x):
        return interpolate_nearest(x, self.scale_factor)


if __name__ == "__main__":
    key = jax.random.PRNGKey(0)

    # Primary check: small NCHW input, matching the PyTorch module.
    x = jax.random.normal(key, (2, 4, 16, 16), dtype=jnp.float32)
    model = Interpolate(scale_factor=2, mode="nearest")
    y = jax.block_until_ready(model(x))
    ref = jnp.repeat(jnp.repeat(x, 2, axis=2), 2, axis=3)
    assert y.shape == (2, 4, 32, 32), y.shape
    assert y.dtype == x.dtype, y.dtype
    assert bool(jnp.array_equal(y, ref)), "mismatch vs reference (small W)"

    # Secondary check: wide rows (no lane folding, g == 1).
    x2 = jax.random.normal(jax.random.PRNGKey(0), (1, 2, 8, 160),
                           dtype=jnp.float32)
    y2 = jax.block_until_ready(Interpolate(2)(x2))
    ref2 = jnp.repeat(jnp.repeat(x2, 2, axis=2), 2, axis=3)
    assert y2.shape == (1, 2, 16, 320), y2.shape
    assert bool(jnp.array_equal(y2, ref2)), "mismatch vs reference (wide W)"

    print("KERNEL_OK")
</pallas_src>

<mosaic_0001>
module attributes {stable_mosaic.version = 11 : i64} {
  func.func @_upsample_kernel(%arg0: i32, %arg1: memref<8x128xf32, #tpu.memory_space<vmem>>, %arg2: memref<8x512xf32, #tpu.memory_space<vmem>>) attributes {dimension_semantics = [#tpu.dimension_semantics<parallel>], iteration_bounds = array<i64: 2>, scalar_prefetch = 0 : i64, scratch_operands = 0 : i64, tpu.core_type = #tpu.core_type<tc>, window_params = [{transform_indices = @transform_0, window_bounds = array<i64: 8, 128>}, {transform_indices = @transform_1, window_bounds = array<i64: 8, 512>}]} {
    %c0 = arith.constant 0 : index
    %c0_0 = arith.constant 0 : index
    %0 = vector.load %arg1[%c0, %c0_0] : memref<8x128xf32, #tpu.memory_space<vmem>>, vector<8x16xf32>
    %1 = vector.shape_cast %0 : vector<8x16xf32> to vector<8x16x1xf32>
    %2 = vector.broadcast %1 : vector<8x16x1xf32> to vector<8x16x2xf32>
    %3 = vector.shape_cast %2 : vector<8x16x2xf32> to vector<8x32xf32>
    %c0_1 = arith.constant 0 : index
    %c0_2 = arith.constant 0 : index
    %4 = vector.load %arg2[%c0_1, %c0_2] : memref<8x512xf32, #tpu.memory_space<vmem>>, vector<8x32xf32>
    tpu.vector_store %arg2[%c0_1, %c0_2], %3 {strides = array<i32>} : memref<8x512xf32, #tpu.memory_space<vmem>>, vector<8x32xf32>,
    %c0_3 = arith.constant 0 : index
    %c32 = arith.constant 32 : index
    %5 = vector.load %arg2[%c0_3, %c32] : memref<8x512xf32, #tpu.memory_space<vmem>>, vector<8x32xf32>
    tpu.vector_store %arg2[%c0_3, %c32], %3 {strides = array<i32>} : memref<8x512xf32, #tpu.memory_space<vmem>>, vector<8x32xf32>,
    %c0_4 = arith.constant 0 : index
    %c16 = arith.constant 16 : index
    %6 = vector.load %arg1[%c0_4, %c16] : memref<8x128xf32, #tpu.memory_space<vmem>>, vector<8x16xf32>
    %7 = vector.shape_cast %6 : vector<8x16xf32> to vector<8x16x1xf32>
    %8 = vector.broadcast %7 : vector<8x16x1xf32> to vector<8x16x2xf32>
    %9 = vector.shape_cast %8 : vector<8x16x2xf32> to vector<8x32xf32>
    %c0_5 = arith.constant 0 : index
    %c64 = arith.constant 64 : index
    %10 = vector.load %arg2[%c0_5, %c64] : memref<8x512xf32, #tpu.memory_space<vmem>>, vector<8x32xf32>
    tpu.vector_store %arg2[%c0_5, %c64], %9 {strides = array<i32>} : memref<8x512xf32, #tpu.memory_space<vmem>>, vector<8x32xf32>,
    %c0_6 = arith.constant 0 : index
    %c96 = arith.constant 96 : index
    %11 = vector.load %arg2[%c0_6, %c96] : memref<8x512xf32, #tpu.memory_space<vmem>>, vector<8x32xf32>
    tpu.vector_store %arg2[%c0_6, %c96], %9 {strides = array<i32>} : memref<8x512xf32, #tpu.memory_space<vmem>>, vector<8x32xf32>,
    %c0_7 = arith.constant 0 : index
    %c32_8 = arith.constant 32 : index
    %12 = vector.load %arg1[%c0_7, %c32_8] : memref<8x128xf32, #tpu.memory_space<vmem>>, vector<8x16xf32>
    %13 = vector.shape_cast %12 : vector<8x16xf32> to vector<8x16x1xf32>
    %14 = vector.broadcast %13 : vector<8x16x1xf32> to vector<8x16x2xf32>
    %15 = vector.shape_cast %14 : vector<8x16x2xf32> to vector<8x32xf32>
    %c0_9 = arith.constant 0 : index
    %c128 = arith.constant 128 : index
    %16 = vector.load %arg2[%c0_9, %c128] : memref<8x512xf32, #tpu.memory_space<vmem>>, vector<8x32xf32>
    tpu.vector_store %arg2[%c0_9, %c128], %15 {strides = array<i32>} : memref<8x512xf32, #tpu.memory_space<vmem>>, vector<8x32xf32>,
    %c0_10 = arith.constant 0 : index
    %c160 = arith.constant 160 : index
    %17 = vector.load %arg2[%c0_10, %c160] : memref<8x512xf32, #tpu.memory_space<vmem>>, vector<8x32xf32>
    tpu.vector_store %arg2[%c0_10, %c160], %15 {strides = array<i32>} : memref<8x512xf32, #tpu.memory_space<vmem>>, vector<8x32xf32>,
    %c0_11 = arith.constant 0 : index
    %c48 = arith.constant 48 : index
    %18 = vector.load %arg1[%c0_11, %c48] : memref<8x128xf32, #tpu.memory_space<vmem>>, vector<8x16xf32>
    %19 = vector.shape_cast %18 : vector<8x16xf32> to vector<8x16x1xf32>
    %20 = vector.broadcast %19 : vector<8x16x1xf32> to vector<8x16x2xf32>
    %21 = vector.shape_cast %20 : vector<8x16x2xf32> to vector<8x32xf32>
    %c0_12 = arith.constant 0 : index
    %c192 = arith.constant 192 : index
    %22 = vector.load %arg2[%c0_12, %c192] : memref<8x512xf32, #tpu.memory_space<vmem>>, vector<8x32xf32>
    tpu.vector_store %arg2[%c0_12, %c192], %21 {strides = array<i32>} : memref<8x512xf32, #tpu.memory_space<vmem>>, vector<8x32xf32>,
    %c0_13 = arith.constant 0 : index
    %c224 = arith.constant 224 : index
    %23 = vector.load %arg2[%c0_13, %c224] : memref<8x512xf32, #tpu.memory_space<vmem>>, vector<8x32xf32>
    tpu.vector_store %arg2[%c0_13, %c224], %21 {strides = array<i32>} : memref<8x512xf32, #tpu.memory_space<vmem>>, vector<8x32xf32>,
    %c0_14 = arith.constant 0 : index
    %c64_15 = arith.constant 64 : index
    %24 = vector.load %arg1[%c0_14, %c64_15] : memref<8x128xf32, #tpu.memory_space<vmem>>, vector<8x16xf32>
    %25 = vector.shape_cast %24 : vector<8x16xf32> to vector<8x16x1xf32>
    %26 = vector.broadcast %25 : vector<8x16x1xf32> to vector<8x16x2xf32>
    %27 = vector.shape_cast %26 : vector<8x16x2xf32> to vector<8x32xf32>
    %c0_16 = arith.constant 0 : index
    %c256 = arith.constant 256 : index
    %28 = vector.load %arg2[%c0_16, %c256] : memref<8x512xf32, #tpu.memory_space<vmem>>, vector<8x32xf32>
    tpu.vector_store %arg2[%c0_16, %c256], %27 {strides = array<i32>} : memref<8x512xf32, #tpu.memory_space<vmem>>, vector<8x32xf32>,
    %c0_17 = arith.constant 0 : index
    %c288 = arith.constant 288 : index
    %29 = vector.load %arg2[%c0_17, %c288] : memref<8x512xf32, #tpu.memory_space<vmem>>, vector<8x32xf32>
    tpu.vector_store %arg2[%c0_17, %c288], %27 {strides = array<i32>} : memref<8x512xf32, #tpu.memory_space<vmem>>, vector<8x32xf32>,
    %c0_18 = arith.constant 0 : index
    %c80 = arith.constant 80 : index
    %30 = vector.load %arg1[%c0_18, %c80] : memref<8x128xf32, #tpu.memory_space<vmem>>, vector<8x16xf32>
    %31 = vector.shape_cast %30 : vector<8x16xf32> to vector<8x16x1xf32>
    %32 = vector.broadcast %31 : vector<8x16x1xf32> to vector<8x16x2xf32>
    %33 = vector.shape_cast %32 : vector<8x16x2xf32> to vector<8x32xf32>
    %c0_19 = arith.constant 0 : index
    %c320 = arith.constant 320 : index
    %34 = vector.load %arg2[%c0_19, %c320] : memref<8x512xf32, #tpu.memory_space<vmem>>, vector<8x32xf32>
    tpu.vector_store %arg2[%c0_19, %c320], %33 {strides = array<i32>} : memref<8x512xf32, #tpu.memory_space<vmem>>, vector<8x32xf32>,
    %c0_20 = arith.constant 0 : index
    %c352 = arith.constant 352 : index
    %35 = vector.load %arg2[%c0_20, %c352] : memref<8x512xf32, #tpu.memory_space<vmem>>, vector<8x32xf32>
    tpu.vector_store %arg2[%c0_20, %c352], %33 {strides = array<i32>} : memref<8x512xf32, #tpu.memory_space<vmem>>, vector<8x32xf32>,
    %c0_21 = arith.constant 0 : index
    %c96_22 = arith.constant 96 : index
    %36 = vector.load %arg1[%c0_21, %c96_22] : memref<8x128xf32, #tpu.memory_space<vmem>>, vector<8x16xf32>
    %37 = vector.shape_cast %36 : vector<8x16xf32> to vector<8x16x1xf32>
    %38 = vector.broadcast %37 : vector<8x16x1xf32> to vector<8x16x2xf32>
    %39 = vector.shape_cast %38 : vector<8x16x2xf32> to vector<8x32xf32>
    %c0_23 = arith.constant 0 : index
    %c384 = arith.constant 384 : index
    %40 = vector.load %arg2[%c0_23, %c384] : memref<8x512xf32, #tpu.memory_space<vmem>>, vector<8x32xf32>
    tpu.vector_store %arg2[%c0_23, %c384], %39 {strides = array<i32>} : memref<8x512xf32, #tpu.memory_space<vmem>>, vector<8x32xf32>,
    %c0_24 = arith.constant 0 : index
    %c416 = arith.constant 416 : index
    %41 = vector.load %arg2[%c0_24, %c416] : memref<8x512xf32, #tpu.memory_space<vmem>>, vector<8x32xf32>
    tpu.vector_store %arg2[%c0_24, %c416], %39 {strides = array<i32>} : memref<8x512xf32, #tpu.memory_space<vmem>>, vector<8x32xf32>,
    %c0_25 = arith.constant 0 : index
    %c112 = arith.constant 112 : index
    %42 = vector.load %arg1[%c0_25, %c112] : memref<8x128xf32, #tpu.memory_space<vmem>>, vector<8x16xf32>
    %43 = vector.shape_cast %42 : vector<8x16xf32> to vector<8x16x1xf32>
    %44 = vector.broadcast %43 : vector<8x16x1xf32> to vector<8x16x2xf32>
    %45 = vector.shape_cast %44 : vector<8x16x2xf32> to vector<8x32xf32>
    %c0_26 = arith.constant 0 : index
    %c448 = arith.constant 448 : index
    %46 = vector.load %arg2[%c0_26, %c448] : memref<8x512xf32, #tpu.memory_space<vmem>>, vector<8x32xf32>
    tpu.vector_store %arg2[%c0_26, %c448], %45 {strides = array<i32>} : memref<8x512xf32, #tpu.memory_space<vmem>>, vector<8x32xf32>,
    %c0_27 = arith.constant 0 : index
    %c480 = arith.constant 480 : index
    %47 = vector.load %arg2[%c0_27, %c480] : memref<8x512xf32, #tpu.memory_space<vmem>>, vector<8x32xf32>
    tpu.vector_store %arg2[%c0_27, %c480], %45 {strides = array<i32>} : memref<8x512xf32, #tpu.memory_space<vmem>>, vector<8x32xf32>,
    return
  }
  func.func @transform_0(%arg0: i32) -> (i32, i32) {
    %c0_i32 = arith.constant 0 : i32
    %c0_i32_0 = arith.constant 0 : i32
    return %arg0, %c0_i32 : i32, i32
  }
  func.func @transform_1(%arg0: i32) -> (i32, i32) {
    %c0_i32 = arith.constant 0 : i32
    %c0_i32_0 = arith.constant 0 : i32
    return %arg0, %c0_i32 : i32, i32
  }
}

</mosaic_0001>

<llo_original>
// kernel: run.1
$region0: #{run.1}
  #allocation0 [shape = 'u32[]', space=smem, size = 0x4, offset = 0x4, fixed_abs, tag = 'smem constant byte address 0x4 - core index']
  #allocation1 [shape = 'u32[144,128]{1,0:T(1,128)}', space=vmem, size = 0x12000, scoped, tag = 'internal scratch']
  %s0 = inlined_call_operand.vmem [shape: f32[16,128], index: 0, kind: input, shape index: {}]
  %s1 = inlined_call_operand.vmem [shape: f32[16,512], index: 1, kind: output, shape index: {}]
  %s2 = sld [smem:[#allocation0]]
  $region37: #{run.1} parent=0
    _
  %s4 = ssub.s32 1, %s2
  %s5 = scalar_select 0, %s4, %s2
  loop: start=0, step=1, limit=4
  $region2: #{run.1} parent=0 // loop_pre_header
    _
  $region3: #{run.1} parent=0 // loop_header
    %s7 = sphi 0, %s11
    %p8 = scmp.ge.s32.totalorder %s7, 4
    %s17 = sphi 0, %s19
    %s20 = sphi 0, %s17
    %s21 = sphi 0, %s20
    %s37 = sphi 0, %s21
    %s43 = sphi 0, %s45
    %s46 = sphi 0, %s43
    %s47 = sphi 0, %s46
    %s63 = sphi 0, %s47
  $region4: #{run.1} parent=0 // loop_header_branch
    %10 = sbr.rel (%p8) target = $region8
  $region5: #{run.1} parent=0 // loop_body
    %s12 = ssub.s32 %s7, 1
    %s13 = ssub.s32 %s7, 2
    %s14 = sadd.s32 %s7, 1
    %s15 = ssub.s32 %s7, %s14
    %p16 = scmp.eq.s32.totalorder %s15, 0
    %s18 = sadd.s32 %s17, 1
    %s19 = scalar_select %p16, %s17, %s18
    %p22 = pneg %p16
    %p23 = scmp.eq.s32.totalorder %s7, 1
    %p24 = por %p22, %p23
    %p25 = scmp.ne.s32.totalorder %s17, %s20
    %p26 = scmp.eq.s32.totalorder %s7, 0
    %p27 = por %p25, %p26
    %p28 = scmp.ne.s32.totalorder %s17, %s20
    %p29 = scmp.eq.s32.totalorder %s12, 1
    %p30 = por %p28, %p29
    %p31 = scmp.ne.s32.totalorder %s20, %s21
    %p32 = scmp.eq.s32.totalorder %s12, 0
    %p33 = por %p31, %p32
    %p34 = scmp.ne.s32.totalorder %s20, %s21
    %p35 = scmp.eq.s32.totalorder %s13, 1
    %p36 = por %p34, %p35
    %p38 = scmp.ne.s32.totalorder %s21, %s37
    %p39 = scmp.eq.s32.totalorder %s13, 0
    %p40 = por %p38, %p39
    %s41 = ssub.s32 %s7, %s14
    %p42 = scmp.eq.s32.totalorder %s41, 0
    %s44 = sadd.s32 %s43, 1
    %s45 = scalar_select %p42, %s43, %s44
    %p48 = pneg %p42
    %p49 = scmp.eq.s32.totalorder %s7, 1
    %p50 = por %p48, %p49
    %p51 = scmp.ne.s32.totalorder %s43, %s46
    %p52 = scmp.eq.s32.totalorder %s7, 0
    %p53 = por %p51, %p52
    %p54 = scmp.ne.s32.totalorder %s43, %s46
    %p55 = scmp.eq.s32.totalorder %s12, 1
    %p56 = por %p54, %p55
    %p57 = scmp.ne.s32.totalorder %s46, %s47
    %p58 = scmp.eq.s32.totalorder %s12, 0
    %p59 = por %p57, %p58
    %p60 = scmp.ne.s32.totalorder %s46, %s47
    %p61 = scmp.eq.s32.totalorder %s13, 1
    %p62 = por %p60, %p61
    %p64 = scmp.ne.s32.totalorder %s47, %s63
    %p65 = scmp.eq.s32.totalorder %s13, 0
    %p66 = por %p64, %p65
    %p67 = scmp.le.s32.totalorder 1, %s7
    %p68 = scmp.lt.s32.totalorder %s7, 3
    %p69 = pnand %p67, %p68
    %p70 = pneg %p69
    // Predicated region
    $region9: #{run.1} parent=5 // pred_check
      _
    $region10: #{run.1} parent=5 // pred_check_branch
      %72 = sbr.rel (%p69) target = $region12
    $region11: #{run.1} parent=5 // pred_region
      %s73 = ssub.s32 %s7, 1
    $region12: #{run.1} parent=5 // pred_fallthru
      _
    %p74 = scmp.lt.s32.totalorder %s7, 2
    // Predicated region
    $region13: #{run.1} parent=5 // pred_check
      %p75 = pneg %p74
    $region14: #{run.1} parent=5 // pred_check_branch
      %77 = sbr.rel (%p75) target = $region16
    $region15: #{run.1} parent=5 // pred_region
      // Predicated region
      $region17: #{run.1} parent=15 // pred_check
        %p78 = pneg %p27
      $region18: #{run.1} parent=15 // pred_check_branch
        %80 = sbr.rel (%p78) target = $region20
      $region19: #{run.1} parent=15 // pred_region
        %p81 = scmp.lt.s32.totalorder %s7, 1
        %s82 = scalar_select %p81, %s7, 1
        %s83 = smul.addr %s82, 8
        %s84 = scalar_lea.vmem %s0, %s83
      $region20: #{run.1} parent=15 // pred_fallthru
        _
    $region16: #{run.1} parent=5 // pred_fallthru
      _
    %p85 = scmp.le.s32.totalorder 1, %s7
    %p86 = scmp.lt.s32.totalorder %s7, 3
    %p87 = pnand %p85, %p86
    %p88 = pneg %p87
    // Predicated region
    $region21: #{run.1} parent=5 // pred_check
      _
    $region22: #{run.1} parent=5 // pred_check_branch
      %90 = sbr.rel (%p87) target = $region24
    $region23: #{run.1} parent=5 // pred_region
      %s91 = ssub.s32 %s7, 1
      %p92 = scmp.lt.s32.totalorder %s12, 1
      %s93 = scalar_select %p92, %s12, 1
      %s94 = smul.addr %s93, 8
      %s95 = scalar_lea.vmem %s0, %s94
      %p96 = pneg %p33
      %p97 = pneg %p30
      %p98 = pneg %p59
      %p99 = pneg %p56
      %p100 = scmp.lt.s32.totalorder %s12, 1
      %s101 = scalar_select %p100, %s12, 1
      %s102 = smul.addr %s101, 4
      %s103 = smul.addr %s102, 8
      %s104 = scalar_lea.vmem %s1, %s103
      %p105 = scmp.lt.s32.totalorder %s12, 1
      %s106 = scalar_select %p105, %s12, 1
      %s107 = smul.addr %s106, 8
      %s108 = scalar_lea.vmem %s0, %s107
      %p109 = scmp.lt.s32.totalorder %s12, 1
      %s110 = scalar_select %p109, %s12, 1
      %s111 = smul.addr %s110, 4
      %s112 = smul.addr %s111, 8
      %s113 = scalar_lea.vmem %s1, %s112
      %v114 = vld [vmem:[%s108] sm:$0xff]
      %v115 = vlaneseq
      %v116 = vshrl.u32 %v115, 7
      %v117 = vsub.s32 0, %v116
      %v118 = vrot.slane %v114, %v117
      %120 = vbcast.lane.b32.xlu0 %v118, 256
      %v121 = vpop.permute.xlu0 %120
      %s123 = sor.u32 256, 8
      %124 = vbcast.lane.b32.xlu0 %v118, %s123
      %v125 = vpop.permute.xlu0 %124
      %v126 = vlaneseq
      %v127 = vshrl.u32 %v126, 7
      %v128 = vsub.s32 1, %v127
      %v129 = vrot.slane %v114, %v128
      %131 = vbcast.lane.b32.xlu0 %v129, 256
      %v132 = vpop.permute.xlu0 %131
      %s134 = sor.u32 256, 8
      %135 = vbcast.lane.b32.xlu0 %v129, %s134
      %v136 = vpop.permute.xlu0 %135
      %v137 = vlaneseq
      %v138 = vshrl.u32 %v137, 7
      %v139 = vsub.s32 2, %v138
      %v140 = vrot.slane %v114, %v139
      %142 = vbcast.lane.b32.xlu0 %v140, 256
      %v143 = vpop.permute.xlu0 %142
      %s145 = sor.u32 256, 8
      %146 = vbcast.lane.b32.xlu0 %v140, %s145
      %v147 = vpop.permute.xlu0 %146
      %v148 = vlaneseq
      %v149 = vshrl.u32 %v148, 7
      %v150 = vsub.s32 3, %v149
      %v151 = vrot.slane %v114, %v150
      %153 = vbcast.lane.b32.xlu0 %v151, 256
      %v154 = vpop.permute.xlu0 %153
      %s156 = sor.u32 256, 8
      %157 = vbcast.lane.b32.xlu0 %v151, %s156
      %v158 = vpop.permute.xlu0 %157
      %v159 = vlaneseq
      %v160 = vshrl.u32 %v159, 7
      %v161 = vsub.s32 4, %v160
      %v162 = vrot.slane %v114, %v161
      %164 = vbcast.lane.b32.xlu0 %v162, 256
      %v165 = vpop.permute.xlu0 %164
      %s167 = sor.u32 256, 8
      %168 = vbcast.lane.b32.xlu0 %v162, %s167
      %v169 = vpop.permute.xlu0 %168
      %v170 = vlaneseq
      %v171 = vshrl.u32 %v170, 7
      %v172 = vsub.s32 5, %v171
      %v173 = vrot.slane %v114, %v172
      %175 = vbcast.lane.b32.xlu0 %v173, 256
      %v176 = vpop.permute.xlu0 %175
      %s178 = sor.u32 256, 8
      %179 = vbcast.lane.b32.xlu0 %v173, %s178
      %v180 = vpop.permute.xlu0 %179
      %v181 = vlaneseq
      %v182 = vshrl.u32 %v181, 7
      %v183 = vsub.s32 6, %v182
      %v184 = vrot.slane %v114, %v183
      %186 = vbcast.lane.b32.xlu0 %v184, 256
      %v187 = vpop.permute.xlu0 %186
      %s189 = sor.u32 256, 8
      %190 = vbcast.lane.b32.xlu0 %v184, %s189
      %v191 = vpop.permute.xlu0 %190
      %v192 = vlaneseq
      %v193 = vshrl.u32 %v192, 7
      %v194 = vsub.s32 7, %v193
      %v195 = vrot.slane %v114, %v194
      %197 = vbcast.lane.b32.xlu0 %v195, 256
      %v198 = vpop.permute.xlu0 %197
      %s200 = sor.u32 256, 8
      %201 = vbcast.lane.b32.xlu0 %v195, %s200
      %v202 = vpop.permute.xlu0 %201
      %v203 = vcombine.low %v121, %v143
      %v204 = vcombine.high %v121, %v143
      %v206 = vunpack.c.l.s4 1983009808
      %v207 = vunpack.c.0.s8 %v206
      %v208 = vlaneseq
      %v209 = vshrl.u32 %v208, 7
      %v210 = vsub.s32 %v207, %v209
      %v211 = vrot.slane %v203, %v210
      %v213 = vunpack.c.l.s4 1983009808
      %v214 = vunpack.c.0.s8 %v213
      %v215 = vlaneseq
      %v216 = vshrl.u32 %v215, 7
      %v217 = vsub.s32 %v214, %v216
      %v218 = vrot.slane %v204, %v217
      %v219 = vcombine.low %v132, %v154
      %v220 = vcombine.high %v132, %v154
      %v222 = vunpack.c.l.s4 1983009808
      %v223 = vunpack.c.0.s8 %v222
      %v224 = vlaneseq
      %v225 = vshrl.u32 %v224, 7
      %v226 = vsub.s32 %v223, %v225
      %v227 = vrot.slane %v219, %v226
      %v229 = vunpack.c.l.s4 1983009808
      %v230 = vunpack.c.0.s8 %v229
      %v231 = vlaneseq
      %v232 = vshrl.u32 %v231, 7
      %v233 = vsub.s32 %v230, %v232
      %v234 = vrot.slane %v220, %v233
      %v235 = vcombine.low %v165, %v187
      %v236 = vcombine.high %v165, %v187
      %v238 = vunpack.c.l.s4 1983009808
      %v239 = vunpack.c.0.s8 %v238
      %v240 = vlaneseq
      %v241 = vshrl.u32 %v240, 7
      %v242 = vsub.s32 %v239, %v241
      %v243 = vrot.slane %v235, %v242
      %v245 = vunpack.c.l.s4 1983009808
      %v246 = vunpack.c.0.s8 %v245
      %v247 = vlaneseq
      %v248 = vshrl.u32 %v247, 7
      %v249 = vsub.s32 %v246, %v248
      %v250 = vrot.slane %v236, %v249
      %v251 = vcombine.low %v176, %v198
      %v252 = vcombine.high %v176, %v198
      %v254 = vunpack.c.l.s4 1983009808
      %v255 = vunpack.c.0.s8 %v254
      %v256 = vlaneseq
      %v257 = vshrl.u32 %v256, 7
      %v258 = vsub.s32 %v255, %v257
      %v259 = vrot.slane %v251, %v258
      %v261 = vunpack.c.l.s4 1983009808
      %v262 = vunpack.c.0.s8 %v261
      %v263 = vlaneseq
      %v264 = vshrl.u32 %v263, 7
      %v265 = vsub.s32 %v262, %v264
      %v266 = vrot.slane %v252, %v265
      %v267 = vcombine.low %v211, %v227
      %v268 = vcombine.high %v211, %v227
      %v270 = vunpack.c.l.s4 1934713408
      %v271 = vunpack.c.0.s8 %v270
      %v272 = vlaneseq
      %v273 = vshrl.u32 %v272, 7
      %v274 = vsub.s32 %v271, %v273
      %v275 = vrot.slane %v267, %v274
      %v277 = vunpack.c.l.s4 1934713408
      %v278 = vunpack.c.0.s8 %v277
      %v279 = vlaneseq
      %v280 = vshrl.u32 %v279, 7
      %v281 = vsub.s32 %v278, %v280
      %v282 = vrot.slane %v268, %v281
      %v283 = vcombine.low %v218, %v234
      %v284 = vcombine.high %v218, %v234
      %v286 = vunpack.c.l.s4 1934713408
      %v287 = vunpack.c.0.s8 %v286
      %v288 = vlaneseq
      %v289 = vshrl.u32 %v288, 7
      %v290 = vsub.s32 %v287, %v289
      %v291 = vrot.slane %v283, %v290
      %v293 = vunpack.c.l.s4 1934713408
      %v294 = vunpack.c.0.s8 %v293
      %v295 = vlaneseq
      %v296 = vshrl.u32 %v295, 7
      %v297 = vsub.s32 %v294, %v296
      %v298 = vrot.slane %v284, %v297
      %v299 = vcombine.low %v243, %v259
      %v300 = vcombine.high %v243, %v259
      %v302 = vunpack.c.l.s4 1934713408
      %v303 = vunpack.c.0.s8 %v302
      %v304 = vlaneseq
      %v305 = vshrl.u32 %v304, 7
      %v306 = vsub.s32 %v303, %v305
      %v307 = vrot.slane %v299, %v306
      %v309 = vunpack.c.l.s4 1934713408
      %v310 = vunpack.c.0.s8 %v309
      %v311 = vlaneseq
      %v312 = vshrl.u32 %v311, 7
      %v313 = vsub.s32 %v310, %v312
      %v314 = vrot.slane %v300, %v313
      %v315 = vcombine.low %v250, %v266
      %v316 = vcombine.high %v250, %v266
      %v318 = vunpack.c.l.s4 1934713408
      %v319 = vunpack.c.0.s8 %v318
      %v320 = vlaneseq
      %v321 = vshrl.u32 %v320, 7
      %v322 = vsub.s32 %v319, %v321
      %v323 = vrot.slane %v315, %v322
      %v325 = vunpack.c.l.s4 1934713408
      %v326 = vunpack.c.0.s8 %v325
      %v327 = vlaneseq
      %v328 = vshrl.u32 %v327, 7
      %v329 = vsub.s32 %v326, %v328
      %v330 = vrot.slane %v316, %v329
      %v331 = vcombine.low %v275, %v307
      %v332 = vcombine.high %v275, %v307
      %v333 = vcombine.low %v282, %v314
      %v334 = vcombine.high %v282, %v314
      %v335 = vcombine.low %v291, %v323
      %v336 = vcombine.high %v291, %v323
      %v337 = vcombine.low %v298, %v330
      %v338 = vcombine.high %v298, %v330
      %v339 = vcombine.low %v125, %v147
      %v340 = vcombine.high %v125, %v147
      %v342 = vunpack.c.l.s4 1983009808
      %v343 = vunpack.c.0.s8 %v342
      %v344 = vlaneseq
      %v345 = vshrl.u32 %v344, 7
      %v346 = vsub.s32 %v343, %v345
      %v347 = vrot.slane %v339, %v346
      %v349 = vunpack.c.l.s4 1983009808
      %v350 = vunpack.c.0.s8 %v349
      %v351 = vlaneseq
      %v352 = vshrl.u32 %v351, 7
      %v353 = vsub.s32 %v350, %v352
      %v354 = vrot.slane %v340, %v353
      %v355 = vcombine.low %v136, %v158
      %v356 = vcombine.high %v136, %v158
      %v358 = vunpack.c.l.s4 1983009808
      %v359 = vunpack.c.0.s8 %v358
      %v360 = vlaneseq
      %v361 = vshrl.u32 %v360, 7
      %v362 = vsub.s32 %v359, %v361
      %v363 = vrot.slane %v355, %v362
      %v365 = vunpack.c.l.s4 1983009808
      %v366 = vunpack.c.0.s8 %v365
      %v367 = vlaneseq
      %v368 = vshrl.u32 %v367, 7
      %v369 = vsub.s32 %v366, %v368
      %v370 = vrot.slane %v356, %v369
      %v371 = vcombine.low %v169, %v191
      %v372 = vcombine.high %v169, %v191
      %v374 = vunpack.c.l.s4 1983009808
      %v375 = vunpack.c.0.s8 %v374
      %v376 = vlaneseq
      %v377 = vshrl.u32 %v376, 7
      %v378 = vsub.s32 %v375, %v377
      %v379 = vrot.slane %v371, %v378
      %v381 = vunpack.c.l.s4 1983009808
      %v382 = vunpack.c.0.s8 %v381
      %v383 = vlaneseq
      %v384 = vshrl.u32 %v383, 7
      %v385 = vsub.s32 %v382, %v384
      %v386 = vrot.slane %v372, %v385
      %v387 = vcombine.low %v180, %v202
      %v388 = vcombine.high %v180, %v202
      %v390 = vunpack.c.l.s4 1983009808
      %v391 = vunpack.c.0.s8 %v390
      %v392 = vlaneseq
      %v393 = vshrl.u32 %v392, 7
      %v394 = vsub.s32 %v391, %v393
      %v395 = vrot.slane %v387, %v394
      %v397 = vunpack.c.l.s4 1983009808
      %v398 = vunpack.c.0.s8 %v397
      %v399 = vlaneseq
      %v400 = vshrl.u32 %v399, 7
      %v401 = vsub.s32 %v398, %v400
      %v402 = vrot.slane %v388, %v401
      %v403 = vcombine.low %v347, %v363
      %v404 = vcombine.high %v347, %v363
      %v406 = vunpack.c.l.s4 1934713408
      %v407 = vunpack.c.0.s8 %v406
      %v408 = vlaneseq
      %v409 = vshrl.u32 %v408, 7
      %v410 = vsub.s32 %v407, %v409
      %v411 = vrot.slane %v403, %v410
      %v413 = vunpack.c.l.s4 1934713408
      %v414 = vunpack.c.0.s8 %v413
      %v415 = vlaneseq
      %v416 = vshrl.u32 %v415, 7
      %v417 = vsub.s32 %v414, %v416
      %v418 = vrot.slane %v404, %v417
      %v419 = vcombine.low %v354, %v370
      %v420 = vcombine.high %v354, %v370
      %v422 = vunpack.c.l.s4 1934713408
      %v423 = vunpack.c.0.s8 %v422
      %v424 = vlaneseq
      %v425 = vshrl.u32 %v424, 7
      %v426 = vsub.s32 %v423, %v425
      %v427 = vrot.slane %v419, %v426
      %v429 = vunpack.c.l.s4 1934713408
      %v430 = vunpack.c.0.s8 %v429
      %v431 = vlaneseq
      %v432 = vshrl.u32 %v431, 7
      %v433 = vsub.s32 %v430, %v432
      %v434 = vrot.slane %v420, %v433
      %v435 = vcombine.low %v379, %v395
      %v436 = vcombine.high %v379, %v395
      %v438 = vunpack.c.l.s4 1934713408
      %v439 = vunpack.c.0.s8 %v438
      %v440 = vlaneseq
      %v441 = vshrl.u32 %v440, 7
      %v442 = vsub.s32 %v439, %v441
      %v443 = vrot.slane %v435, %v442
      %v445 = vunpack.c.l.s4 1934713408
      %v446 = vunpack.c.0.s8 %v445
      %v447 = vlaneseq
      %v448 = vshrl.u32 %v447, 7
      %v449 = vsub.s32 %v446, %v448
      %v450 = vrot.slane %v436, %v449
      %v451 = vcombine.low %v386, %v402
      %v452 = vcombine.high %v386, %v402
      %v454 = vunpack.c.l.s4 1934713408
      %v455 = vunpack.c.0.s8 %v454
      %v456 = vlaneseq
      %v457 = vshrl.u32 %v456, 7
      %v458 = vsub.s32 %v455, %v457
      %v459 = vrot.slane %v451, %v458
      %v461 = vunpack.c.l.s4 1934713408
      %v462 = vunpack.c.0.s8 %v461
      %v463 = vlaneseq
      %v464 = vshrl.u32 %v463, 7
      %v465 = vsub.s32 %v462, %v464
      %v466 = vrot.slane %v452, %v465
      %v467 = vcombine.low %v411, %v443
      %v468 = vcombine.high %v411, %v443
      %v469 = vcombine.low %v418, %v450
      %v470 = vcombine.high %v418, %v450
      %v471 = vcombine.low %v427, %v459
      %v472 = vcombine.high %v427, %v459
      %v473 = vcombine.low %v434, %v466
      %v474 = vcombine.high %v434, %v466
      %476 = vrot.lane.b32.xlu0 %v332, 2
      %v477 = vpop.permute.xlu0 %476
      %480 = vrot.lane.b32.xlu0 %v333, 4
      %v481 = vpop.permute.xlu0 %480
      %484 = vrot.lane.b32.xlu0 %v334, 6
      %v485 = vpop.permute.xlu0 %484
      %488 = vrot.lane.b32.xlu0 %v335, 8
      %v489 = vpop.permute.xlu0 %488
      %492 = vrot.lane.b32.xlu0 %v336, 10
      %v493 = vpop.permute.xlu0 %492
      %496 = vrot.lane.b32.xlu0 %v337, 12
      %v497 = vpop.permute.xlu0 %496
      %500 = vrot.lane.b32.xlu0 %v338, 14
      %v501 = vpop.permute.xlu0 %500
      %504 = vrot.lane.b32.xlu0 %v467, 16
      %v505 = vpop.permute.xlu0 %504
      %508 = vrot.lane.b32.xlu0 %v468, 18
      %v509 = vpop.permute.xlu0 %508
      %512 = vrot.lane.b32.xlu0 %v469, 20
      %v513 = vpop.permute.xlu0 %512
      %516 = vrot.lane.b32.xlu0 %v470, 22
      %v517 = vpop.permute.xlu0 %516
      %520 = vrot.lane.b32.xlu0 %v471, 24
      %v521 = vpop.permute.xlu0 %520
      %524 = vrot.lane.b32.xlu0 %v472, 26
      %v525 = vpop.permute.xlu0 %524
      %528 = vrot.lane.b32.xlu0 %v473, 28
      %v529 = vpop.permute.xlu0 %528
      %532 = vrot.lane.b32.xlu0 %v474, 30
      %v533 = vpop.permute.xlu0 %532
      %vm535 = vcmask 15360
      %v536 = vsel %vm535, %v331, %v477
      %vm537 = vcmask 31744
      %v538 = vsel %vm537, %v536, %v481
      %vm539 = vcmask 48128
      %v540 = vsel %vm539, %v538, %v485
      %vm541 = vcmask 64512
      %v542 = vsel %vm541, %v540, %v489
      %vm543 = vcmask 80896
      %v544 = vsel %vm543, %v542, %v493
      %vm545 = vcmask 97280
      %v546 = vsel %vm545, %v544, %v497
      %vm547 = vcmask 113664
      %v548 = vsel %vm547, %v546, %v501
      %vm549 = vcmask 130048
      %v550 = vsel %vm549, %v548, %v505
      %vm551 = vcmask 146432
      %v552 = vsel %vm551, %v550, %v509
      %vm553 = vcmask 162816
      %v554 = vsel %vm553, %v552, %v513
      %vm555 = vcmask 179200
      %v556 = vsel %vm555, %v554, %v517
      %vm557 = vcmask 195584
      %v558 = vsel %vm557, %v556, %v521
      %vm559 = vcmask 211968
      %v560 = vsel %vm559, %v558, %v525
      %vm561 = vcmask 228352
      %v562 = vsel %vm561, %v560, %v529
      %vm563 = vcmask 244736
      %v564 = vsel %vm563, %v562, %v533
      %vm565 = vcmask 261120
      %566 = vst.msk [vmem:[%s113] sm:$0xff] %vm565, %v564
      %568 = vrot.lane.b32.xlu0 %v564, 32
      %v569 = vpop.permute.xlu0 %568
      %vm571 = vcmask 523520
      %572 = vst.msk [vmem:[%s113] sm:$0xff] %vm571, %v569
      %v573 = vld [vmem:[%s108] sm:$0xff]
      %v574 = vlaneseq
      %v575 = vshrl.u32 %v574, 7
      %v576 = vsub.s32 0, %v575
      %v577 = vrot.slane %v573, %v576
      %s579 = sor.u32 256, 16
      %580 = vbcast.lane.b32.xlu0 %v577, %s579
      %v581 = vpop.permute.xlu0 %580
      %s583 = sor.u32 256, 24
      %584 = vbcast.lane.b32.xlu0 %v577, %s583
      %v585 = vpop.permute.xlu0 %584
      %v586 = vlaneseq
      %v587 = vshrl.u32 %v586, 7
      %v588 = vsub.s32 1, %v587
      %v589 = vrot.slane %v573, %v588
      %s591 = sor.u32 256, 16
      %592 = vbcast.lane.b32.xlu0 %v589, %s591
      %v593 = vpop.permute.xlu0 %592
      %s595 = sor.u32 256, 24
      %596 = vbcast.lane.b32.xlu0 %v589, %s595
      %v597 = vpop.permute.xlu0 %596
      %v598 = vlaneseq
      %v599 = vshrl.u32 %v598, 7
      %v600 = vsub.s32 2, %v599
      %v601 = vrot.slane %v573, %v600
      %s603 = sor.u32 256, 16
      %604 = vbcast.lane.b32.xlu0 %v601, %s603
      %v605 = vpop.permute.xlu0 %604
      %s607 = sor.u32 256, 24
      %608 = vbcast.lane.b32.xlu0 %v601, %s607
      %v609 = vpop.permute.xlu0 %608
      %v610 = vlaneseq
      %v611 = vshrl.u32 %v610, 7
      %v612 = vsub.s32 3, %v611
      %v613 = vrot.slane %v573, %v612
      %s615 = sor.u32 256, 16
      %616 = vbcast.lane.b32.xlu0 %v613, %s615
      %v617 = vpop.permute.xlu0 %616
      %s619 = sor.u32 256, 24
      %620 = vbcast.lane.b32.xlu0 %v613, %s619
      %v621 = vpop.permute.xlu0 %620
      %v622 = vlaneseq
      %v623 = vshrl.u32 %v622, 7
      %v624 = vsub.s32 4, %v623
      %v625 = vrot.slane %v573, %v624
      %s627 = sor.u32 256, 16
      %628 = vbcast.lane.b32.xlu0 %v625, %s627
      %v629 = vpop.permute.xlu0 %628
      %s631 = sor.u32 256, 24
      %632 = vbcast.lane.b32.xlu0 %v625, %s631
      %v633 = vpop.permute.xlu0 %632
      %v634 = vlaneseq
      %v635 = vshrl.u32 %v634, 7
      %v636 = vsub.s32 5, %v635
      %v637 = vrot.slane %v573, %v636
      %s639 = sor.u32 256, 16
      %640 = vbcast.lane.b32.xlu0 %v637, %s639
      %v641 = vpop.permute.xlu0 %640
      %s643 = sor.u32 256, 24
      %644 = vbcast.lane.b32.xlu0 %v637, %s643
      %v645 = vpop.permute.xlu0 %644
      %v646 = vlaneseq
      %v647 = vshrl.u32 %v646, 7
      %v648 = vsub.s32 6, %v647
      %v649 = vrot.slane %v573, %v648
      %s651 = sor.u32 256, 16
      %652 = vbcast.lane.b32.xlu0 %v649, %s651
      %v653 = vpop.permute.xlu0 %652
      %s655 = sor.u32 256, 24
      %656 = vbcast.lane.b32.xlu0 %v649, %s655
      %v657 = vpop.permute.xlu0 %656
      %v658 = vlaneseq
      %v659 = vshrl.u32 %v658, 7
      %v660 = vsub.s32 7, %v659
      %v661 = vrot.slane %v573, %v660
      %s663 = sor.u32 256, 16
      %664 = vbcast.lane.b32.xlu0 %v661, %s663
      %v665 = vpop.permute.xlu0 %664
      %s667 = sor.u32 256, 24
      %668 = vbcast.lane.b32.xlu0 %v661, %s667
      %v669 = vpop.permute.xlu0 %668
      %v670 = vcombine.low %v581, %v605
      %v671 = vcombine.high %v581, %v605
      %v673 = vunpack.c.l.s4 1983009808
      %v674 = vunpack.c.0.s8 %v673
      %v675 = vlaneseq
      %v676 = vshrl.u32 %v675, 7
      %v677 = vsub.s32 %v674, %v676
      %v678 = vrot.slane %v670, %v677
      %v680 = vunpack.c.l.s4 1983009808
      %v681 = vunpack.c.0.s8 %v680
      %v682 = vlaneseq
      %v683 = vshrl.u32 %v682, 7
      %v684 = vsub.s32 %v681, %v683
      %v685 = vrot.slane %v671, %v684
      %v686 = vcombine.low %v593, %v617
      %v687 = vcombine.high %v593, %v617
      %v689 = vunpack.c.l.s4 1983009808
      %v690 = vunpack.c.0.s8 %v689
      %v691 = vlaneseq
      %v692 = vshrl.u32 %v691, 7
      %v693 = vsub.s32 %v690, %v692
      %v694 = vrot.slane %v686, %v693
      %v696 = vunpack.c.l.s4 1983009808
      %v697 = vunpack.c.0.s8 %v696
      %v698 = vlaneseq
      %v699 = vshrl.u32 %v698, 7
      %v700 = vsub.s32 %v697, %v699
      %v701 = vrot.slane %v687, %v700
      %v702 = vcombine.low %v629, %v653
      %v703 = vcombine.high %v629, %v653
      %v705 = vunpack.c.l.s4 1983009808
      %v706 = vunpack.c.0.s8 %v705
      %v707 = vlaneseq
      %v708 = vshrl.u32 %v707, 7
      %v709 = vsub.s32 %v706, %v708
      %v710 = vrot.slane %v702, %v709
      %v712 = vunpack.c.l.s4 1983009808
      %v713 = vunpack.c.0.s8 %v712
      %v714 = vlaneseq
      %v715 = vshrl.u32 %v714, 7
      %v716 = vsub.s32 %v713, %v715
      %v717 = vrot.slane %v703, %v716
      %v718 = vcombine.low %v641, %v665
      %v719 = vcombine.high %v641, %v665
      %v721 = vunpack.c.l.s4 1983009808
      %v722 = vunpack.c.0.s8 %v721
      %v723 = vlaneseq
      %v724 = vshrl.u32 %v723, 7
      %v725 = vsub.s32 %v722, %v724
      %v726 = vrot.slane %v718, %v725
      %v728 = vunpack.c.l.s4 1983009808
      %v729 = vunpack.c.0.s8 %v728
      %v730 = vlaneseq
      %v731 = vshrl.u32 %v730, 7
      %v732 = vsub.s32 %v729, %v731
      %v733 = vrot.slane %v719, %v732
      %v734 = vcombine.low %v678, %v694
      %v735 = vcombine.high %v678, %v694
      %v737 = vunpack.c.l.s4 1934713408
      %v738 = vunpack.c.0.s8 %v737
      %v739 = vlaneseq
      %v740 = vshrl.u32 %v739, 7
      %v741 = vsub.s32 %v738, %v740
      %v742 = vrot.slane %v734, %v741
      %v744 = vunpack.c.l.s4 1934713408
      %v745 = vunpack.c.0.s8 %v744
      %v746 = vlaneseq
      %v747 = vshrl.u32 %v746, 7
      %v748 = vsub.s32 %v745, %v747
      %v749 = vrot.slane %v735, %v748
      %v750 = vcombine.low %v685, %v701
      %v751 = vcombine.high %v685, %v701
      %v753 = vunpack.c.l.s4 1934713408
      %v754 = vunpack.c.0.s8 %v753
      %v755 = vlaneseq
      %v756 = vshrl.u32 %v755, 7
      %v757 = vsub.s32 %v754, %v756
      %v758 = vrot.slane %v750, %v757
      %v760 = vunpack.c.l.s4 1934713408
      %v761 = vunpack.c.0.s8 %v760
      %v762 = vlaneseq
      %v763 = vshrl.u32 %v762, 7
      %v764 = vsub.s32 %v761, %v763
      %v765 = vrot.slane %v751, %v764
      %v766 = vcombine.low %v710, %v726
      %v767 = vcombine.high %v710, %v726
      %v769 = vunpack.c.l.s4 1934713408
      %v770 = vunpack.c.0.s8 %v769
      %v771 = vlaneseq
      %v772 = vshrl.u32 %v771, 7
      %v773 = vsub.s32 %v770, %v772
      %v774 = vrot.slane %v766, %v773
      %v776 = vunpack.c.l.s4 1934713408
      %v777 = vunpack.c.0.s8 %v776
      %v778 = vlaneseq
      %v779 = vshrl.u32 %v778, 7
      %v780 = vsub.s32 %v777, %v779
      %v781 = vrot.slane %v767, %v780
      %v782 = vcombine.low %v717, %v733
      %v783 = vcombine.high %v717, %v733
      %v785 = vunpack.c.l.s4 1934713408
      %v786 = vunpack.c.0.s8 %v785
      %v787 = vlaneseq
      %v788 = vshrl.u32 %v787, 7
      %v789 = vsub.s32 %v786, %v788
      %v790 = vrot.slane %v782, %v789
      %v792 = vunpack.c.l.s4 1934713408
      %v793 = vunpack.c.0.s8 %v792
      %v794 = vlaneseq
      %v795 = vshrl.u32 %v794, 7
      %v796 = vsub.s32 %v793, %v795
      %v797 = vrot.slane %v783, %v796
      %v798 = vcombine.low %v742, %v774
      %v799 = vcombine.high %v742, %v774
      %v800 = vcombine.low %v749, %v781
      %v801 = vcombine.high %v749, %v781
      %v802 = vcombine.low %v758, %v790
      %v803 = vcombine.high %v758, %v790
      %v804 = vcombine.low %v765, %v797
      %v805 = vcombine.high %v765, %v797
      %v806 = vcombine.low %v585, %v609
      %v807 = vcombine.high %v585, %v609
      %v809 = vunpack.c.l.s4 1983009808
      %v810 = vunpack.c.0.s8 %v809
      %v811 = vlaneseq
      %v812 = vshrl.u32 %v811, 7
      %v813 = vsub.s32 %v810, %v812
      %v814 = vrot.slane %v806, %v813
      %v816 = vunpack.c.l.s4 1983009808
      %v817 = vunpack.c.0.s8 %v816
      %v818 = vlaneseq
      %v819 = vshrl.u32 %v818, 7
      %v820 = vsub.s32 %v817, %v819
      %v821 = vrot.slane %v807, %v820
      %v822 = vcombine.low %v597, %v621
      %v823 = vcombine.high %v597, %v621
      %v825 = vunpack.c.l.s4 1983009808
      %v826 = vunpack.c.0.s8 %v825
      %v827 = vlaneseq
      %v828 = vshrl.u32 %v827, 7
      %v829 = vsub.s32 %v826, %v828
      %v830 = vrot.slane %v822, %v829
      %v832 = vunpack.c.l.s4 1983009808
      %v833 = vunpack.c.0.s8 %v832
      %v834 = vlaneseq
      %v835 = vshrl.u32 %v834, 7
      %v836 = vsub.s32 %v833, %v835
      %v837 = vrot.slane %v823, %v836
      %v838 = vcombine.low %v633, %v657
      %v839 = vcombine.high %v633, %v657
      %v841 = vunpack.c.l.s4 1983009808
      %v842 = vunpack.c.0.s8 %v841
      %v843 = vlaneseq
      %v844 = vshrl.u32 %v843, 7
      %v845 = vsub.s32 %v842, %v844
      %v846 = vrot.slane %v838, %v845
      %v848 = vunpack.c.l.s4 1983009808
      %v849 = vunpack.c.0.s8 %v848
      %v850 = vlaneseq
      %v851 = vshrl.u32 %v850, 7
      %v852 = vsub.s32 %v849, %v851
      %v853 = vrot.slane %v839, %v852
      %v854 = vcombine.low %v645, %v669
      %v855 = vcombine.high %v645, %v669
      %v857 = vunpack.c.l.s4 1983009808
      %v858 = vunpack.c.0.s8 %v857
      %v859 = vlaneseq
      %v860 = vshrl.u32 %v859, 7
      %v861 = vsub.s32 %v858, %v860
      %v862 = vrot.slane %v854, %v861
      %v864 = vunpack.c.l.s4 1983009808
      %v865 = vunpack.c.0.s8 %v864
      %v866 = vlaneseq
      %v867 = vshrl.u32 %v866, 7
      %v868 = vsub.s32 %v865, %v867
      %v869 = vrot.slane %v855, %v868
      %v870 = vcombine.low %v814, %v830
      %v871 = vcombine.high %v814, %v830
      %v873 = vunpack.c.l.s4 1934713408
      %v874 = vunpack.c.0.s8 %v873
      %v875 = vlaneseq
      %v876 = vshrl.u32 %v875, 7
      %v877 = vsub.s32 %v874, %v876
      %v878 = vrot.slane %v870, %v877
      %v880 = vunpack.c.l.s4 1934713408
      %v881 = vunpack.c.0.s8 %v880
      %v882 = vlaneseq
      %v883 = vshrl.u32 %v882, 7
      %v884 = vsub.s32 %v881, %v883
      %v885 = vrot.slane %v871, %v884
      %v886 = vcombine.low %v821, %v837
      %v887 = vcombine.high %v821, %v837
      %v889 = vunpack.c.l.s4 1934713408
      %v890 = vunpack.c.0.s8 %v889
      %v891 = vlaneseq
      %v892 = vshrl.u32 %v891, 7
      %v893 = vsub.s32 %v890, %v892
      %v894 = vrot.slane %v886, %v893
      %v896 = vunpack.c.l.s4 1934713408
      %v897 = vunpack.c.0.s8 %v896
      %v898 = vlaneseq
      %v899 = vshrl.u32 %v898, 7
      %v900 = vsub.s32 %v897, %v899
      %v901 = vrot.slane %v887, %v900
      %v902 = vcombine.low %v846, %v862
      %v903 = vcombine.high %v846, %v862
      %v905 = vunpack.c.l.s4 1934713408
      %v906 = vunpack.c.0.s8 %v905
      %v907 = vlaneseq
      %v908 = vshrl.u32 %v907, 7
      %v909 = vsub.s32 %v906, %v908
      %v910 = vrot.slane %v902, %v909
      %v912 = vunpack.c.l.s4 1934713408
      %v913 = vunpack.c.0.s8 %v912
      %v914 = vlaneseq
      %v915 = vshrl.u32 %v914, 7
      %v916 = vsub.s32 %v913, %v915
      %v917 = vrot.slane %v903, %v916
      %v918 = vcombine.low %v853, %v869
      %v919 = vcombine.high %v853, %v869
      %v921 = vunpack.c.l.s4 1934713408
      %v922 = vunpack.c.0.s8 %v921
      %v923 = vlaneseq
      %v924 = vshrl.u32 %v923, 7
      %v925 = vsub.s32 %v922, %v924
      %v926 = vrot.slane %v918, %v925
      %v928 = vunpack.c.l.s4 1934713408
      %v929 = vunpack.c.0.s8 %v928
      %v930 = vlaneseq
      %v931 = vshrl.u32 %v930, 7
      %v932 = vsub.s32 %v929, %v931
      %v933 = vrot.slane %v919, %v932
      %v934 = vcombine.low %v878, %v910
      %v935 = vcombine.high %v878, %v910
      %v936 = vcombine.low %v885, %v917
      %v937 = vcombine.high %v885, %v917
      %v938 = vcombine.low %v894, %v926
      %v939 = vcombine.high %v894, %v926
      %v940 = vcombine.low %v901, %v933
      %v941 = vcombine.high %v901, %v933
      %943 = vrot.lane.b32.xlu0 %v799, 2
      %v944 = vpop.permute.xlu0 %943
      %947 = vrot.lane.b32.xlu0 %v800, 4
      %v948 = vpop.permute.xlu0 %947
      %951 = vrot.lane.b32.xlu0 %v801, 6
      %v952 = vpop.permute.xlu0 %951
      %955 = vrot.lane.b32.xlu0 %v802, 8
      %v956 = vpop.permute.xlu0 %955
      %959 = vrot.lane.b32.xlu0 %v803, 10
      %v960 = vpop.permute.xlu0 %959
      %963 = vrot.lane.b32.xlu0 %v804, 12
      %v964 = vpop.permute.xlu0 %963
      %967 = vrot.lane.b32.xlu0 %v805, 14
      %v968 = vpop.permute.xlu0 %967
      %971 = vrot.lane.b32.xlu0 %v934, 16
      %v972 = vpop.permute.xlu0 %971
      %975 = vrot.lane.b32.xlu0 %v935, 18
      %v976 = vpop.permute.xlu0 %975
      %979 = vrot.lane.b32.xlu0 %v936, 20
      %v980 = vpop.permute.xlu0 %979
      %983 = vrot.lane.b32.xlu0 %v937, 22
      %v984 = vpop.permute.xlu0 %983
      %987 = vrot.lane.b32.xlu0 %v938, 24
      %v988 = vpop.permute.xlu0 %987
      %991 = vrot.lane.b32.xlu0 %v939, 26
      %v992 = vpop.permute.xlu0 %991
      %995 = vrot.lane.b32.xlu0 %v940, 28
      %v996 = vpop.permute.xlu0 %995
      %999 = vrot.lane.b32.xlu0 %v941, 30
      %v1000 = vpop.permute.xlu0 %999
      %v1002 = vsel %vm535, %v798, %v944
      %v1003 = vsel %vm537, %v1002, %v948
      %v1004 = vsel %vm539, %v1003, %v952
      %v1005 = vsel %vm541, %v1004, %v956
      %v1006 = vsel %vm543, %v1005, %v960
      %v1007 = vsel %vm545, %v1006, %v964
      %v1008 = vsel %vm547, %v1007, %v968
      %v1009 = vsel %vm549, %v1008, %v972
      %v1010 = vsel %vm551, %v1009, %v976
      %v1011 = vsel %vm553, %v1010, %v980
      %v1012 = vsel %vm555, %v1011, %v984
      %v1013 = vsel %vm557, %v1012, %v988
      %v1014 = vsel %vm559, %v1013, %v992
      %v1015 = vsel %vm561, %v1014, %v996
      %v1016 = vsel %vm563, %v1015, %v1000
      %1018 = vrot.lane.b32.xlu0 %v1016, 64
      %v1019 = vpop.permute.xlu0 %1018
      %vm1021 = vcmask 785920
      %1022 = vst.msk [vmem:[%s113] sm:$0xff] %vm1021, %v1019
      %1023 = vrot.lane.b32.xlu0 %v1016, 96
      %v1024 = vpop.permute.xlu0 %1023
      %vm1026 = vcmask 1048320
      %1027 = vst.msk [vmem:[%s113] sm:$0xff] %vm1026, %v1024
      %v1028 = vld [vmem:[%s108] sm:$0xff]
      %v1029 = vlaneseq
      %v1030 = vshrl.u32 %v1029, 7
      %v1031 = vsub.s32 0, %v1030
      %v1032 = vrot.slane %v1028, %v1031
      %s1034 = sor.u32 256, 32
      %1035 = vbcast.lane.b32.xlu0 %v1032, %s1034
      %v1036 = vpop.permute.xlu0 %1035
      %s1038 = sor.u32 256, 40
      %1039 = vbcast.lane.b32.xlu0 %v1032, %s1038
      %v1040 = vpop.permute.xlu0 %1039
      %v1041 = vlaneseq
      %v1042 = vshrl.u32 %v1041, 7
      %v1043 = vsub.s32 1, %v1042
      %v1044 = vrot.slane %v1028, %v1043
      %s1046 = sor.u32 256, 32
      %1047 = vbcast.lane.b32.xlu0 %v1044, %s1046
      %v1048 = vpop.permute.xlu0 %1047
      %s1050 = sor.u32 256, 40
      %1051 = vbcast.lane.b32.xlu0 %v1044, %s1050
      %v1052 = vpop.permute.xlu0 %1051
      %v1053 = vlaneseq
      %v1054 = vshrl.u32 %v1053, 7
      %v1055 = vsub.s32 2, %v1054
      %v1056 = vrot.slane %v1028, %v1055
      %s1058 = sor.u32 256, 32
      %1059 = vbcast.lane.b32.xlu0 %v1056, %s1058
      %v1060 = vpop.permute.xlu0 %1059
      %s1062 = sor.u32 256, 40
      %1063 = vbcast.lane.b32.xlu0 %v1056, %s1062
      %v1064 = vpop.permute.xlu0 %1063
      %v1065 = vlaneseq
      %v1066 = vshrl.u32 %v1065, 7
      %v1067 = vsub.s32 3, %v1066
      %v1068 = vrot.slane %v1028, %v1067
      %s1070 = sor.u32 256, 32
      %1071 = vbcast.lane.b32.xlu0 %v1068, %s1070
      %v1072 = vpop.permute.xlu0 %1071
      %s1074 = sor.u32 256, 40
      %1075 = vbcast.lane.b32.xlu0 %v1068, %s1074
      %v1076 = vpop.permute.xlu0 %1075
      %v1077 = vlaneseq
      %v1078 = vshrl.u32 %v1077, 7
      %v1079 = vsub.s32 4, %v1078
      %v1080 = vrot.slane %v1028, %v1079
      %s1082 = sor.u32 256, 32
      %1083 = vbcast.lane.b32.xlu0 %v1080, %s1082
      %v1084 = vpop.permute.xlu0 %1083
      %s1086 = sor.u32 256, 40
      %1087 = vbcast.lane.b32.xlu0 %v1080, %s1086
      %v1088 = vpop.permute.xlu0 %1087
      %v1089 = vlaneseq
      %v1090 = vshrl.u32 %v1089, 7
      %v1091 = vsub.s32 5, %v1090
      %v1092 = vrot.slane %v1028, %v1091
      %s1094 = sor.u32 256, 32
      %1095 = vbcast.lane.b32.xlu0 %v1092, %s1094
      %v1096 = vpop.permute.xlu0 %1095
      %s1098 = sor.u32 256, 40
      %1099 = vbcast.lane.b32.xlu0 %v1092, %s1098
      %v1100 = vpop.permute.xlu0 %1099
      %v1101 = vlaneseq
      %v1102 = vshrl.u32 %v1101, 7
      %v1103 = vsub.s32 6, %v1102
      %v1104 = vrot.slane %v1028, %v1103
      %s1106 = sor.u32 256, 32
      %1107 = vbcast.lane.b32.xlu0 %v1104, %s1106
      %v1108 = vpop.permute.xlu0 %1107
      %s1110 = sor.u32 256, 40
      %1111 = vbcast.lane.b32.xlu0 %v1104, %s1110
      %v1112 = vpop.permute.xlu0 %1111
      %v1113 = vlaneseq
      %v1114 = vshrl.u32 %v1113, 7
      %v1115 = vsub.s32 7, %v1114
      %v1116 = vrot.slane %v1028, %v1115
      %s1118 = sor.u32 256, 32
      %1119 = vbcast.lane.b32.xlu0 %v1116, %s1118
      %v1120 = vpop.permute.xlu0 %1119
      %s1122 = sor.u32 256, 40
      %1123 = vbcast.lane.b32.xlu0 %v1116, %s1122
      %v1124 = vpop.permute.xlu0 %1123
      %v1125 = vcombine.low %v1036, %v1060
      %v1126 = vcombine.high %v1036, %v1060
      %v1128 = vunpack.c.l.s4 1983009808
      %v1129 = vunpack.c.0.s8 %v1128
      %v1130 = vlaneseq
      %v1131 = vshrl.u32 %v1130, 7
      %v1132 = vsub.s32 %v1129, %v1131
      %v1133 = vrot.slane %v1125, %v1132
      %v1135 = vunpack.c.l.s4 1983009808
      %v1136 = vunpack.c.0.s8 %v1135
      %v1137 = vlaneseq
      %v1138 = vshrl.u32 %v1137, 7
      %v1139 = vsub.s32 %v1136, %v1138
      %v1140 = vrot.slane %v1126, %v1139
      %v1141 = vcombine.low %v1048, %v1072
      %v1142 = vcombine.high %v1048, %v1072
      %v1144 = vunpack.c.l.s4 1983009808
      %v1145 = vunpack.c.0.s8 %v1144
      %v1146 = vlaneseq
      %v1147 = vshrl.u32 %v1146, 7
      %v1148 = vsub.s32 %v1145, %v1147
      %v1149 = vrot.slane %v1141, %v1148
      %v1151 = vunpack.c.l.s4 1983009808
      %v1152 = vunpack.c.0.s8 %v1151
      %v1153 = vlaneseq
      %v1154 = vshrl.u32 %v1153, 7
      %v1155 = vsub.s32 %v1152, %v1154
      %v1156 = vrot.slane %v1142, %v1155
      %v1157 = vcombine.low %v1084, %v1108
      %v1158 = vcombine.high %v1084, %v1108
      %v1160 = vunpack.c.l.s4 1983009808
      %v1161 = vunpack.c.0.s8 %v1160
      %v1162 = vlaneseq
      %v1163 = vshrl.u32 %v1162, 7
      %v1164 = vsub.s32 %v1161, %v1163
      %v1165 = vrot.slane %v1157, %v1164
      %v1167 = vunpack.c.l.s4 1983009808
      %v1168 = vunpack.c.0.s8 %v1167
      %v1169 = vlaneseq
      %v1170 = vshrl.u32 %v1169, 7
      %v1171 = vsub.s32 %v1168, %v1170
      %v1172 = vrot.slane %v1158, %v1171
      %v1173 = vcombine.low %v1096, %v1120
      %v1174 = vcombine.high %v1096, %v1120
      %v1176 = vunpack.c.l.s4 1983009808
      %v1177 = vunpack.c.0.s8 %v1176
      %v1178 = vlaneseq
      %v1179 = vshrl.u32 %v1178, 7
      %v1180 = vsub.s32 %v1177, %v1179
      %v1181 = vrot.slane %v1173, %v1180
      %v1183 = vunpack.c.l.s4 1983009808
      %v1184 = vunpack.c.0.s8 %v1183
      %v1185 = vlaneseq
      %v1186 = vshrl.u32 %v1185, 7
      %v1187 = vsub.s32 %v1184, %v1186
      %v1188 = vrot.slane %v1174, %v1187
      %v1189 = vcombine.low %v1133, %v1149
      %v1190 = vcombine.high %v1133, %v1149
      %v1192 = vunpack.c.l.s4 1934713408
      %v1193 = vunpack.c.0.s8 %v1192
      %v1194 = vlaneseq
      %v1195 = vshrl.u32 %v1194, 7
      %v1196 = vsub.s32 %v1193, %v1195
      %v1197 = vrot.slane %v1189, %v1196
      %v1199 = vunpack.c.l.s4 1934713408
      %v1200 = vunpack.c.0.s8 %v1199
      %v1201 = vlaneseq
      %v1202 = vshrl.u32 %v1201, 7
      %v1203 = vsub.s32 %v1200, %v1202
      %v1204 = vrot.slane %v1190, %v1203
      %v1205 = vcombine.low %v1140, %v1156
      %v1206 = vcombine.high %v1140, %v1156
      %v1208 = vunpack.c.l.s4 1934713408
      %v1209 = vunpack.c.0.s8 %v1208
      %v1210 = vlaneseq
      %v1211 = vshrl.u32 %v1210, 7
      %v1212 = vsub.s32 %v1209, %v1211
      %v1213 = vrot.slane %v1205, %v1212
      %v1215 = vunpack.c.l.s4 1934713408
      %v1216 = vunpack.c.0.s8 %v1215
      %v1217 = vlaneseq
      %v1218 = vshrl.u32 %v1217, 7
      %v1219 = vsub.s32 %v1216, %v1218
      %v1220 = vrot.slane %v1206, %v1219
      %v1221 = vcombine.low %v1165, %v1181
      %v1222 = vcombine.high %v1165, %v1181
      %v1224 = vunpack.c.l.s4 1934713408
      %v1225 = vunpack.c.0.s8 %v1224
      %v1226 = vlaneseq
      %v1227 = vshrl.u32 %v1226, 7
      %v1228 = vsub.s32 %v1225, %v1227
      %v1229 = vrot.slane %v1221, %v1228
      %v1231 = vunpack.c.l.s4 1934713408
      %v1232 = vunpack.c.0.s8 %v1231
      %v1233 = vlaneseq
      %v1234 = vshrl.u32 %v1233, 7
      %v1235 = vsub.s32 %v1232, %v1234
      %v1236 = vrot.slane %v1222, %v1235
      %v1237 = vcombine.low %v1172, %v1188
      %v1238 = vcombine.high %v1172, %v1188
      %v1240 = vunpack.c.l.s4 1934713408
      %v1241 = vunpack.c.0.s8 %v1240
      %v1242 = vlaneseq
      %v1243 = vshrl.u32 %v1242, 7
      %v1244 = vsub.s32 %v1241, %v1243
      %v1245 = vrot.slane %v1237, %v1244
      %v1247 = vunpack.c.l.s4 1934713408
      %v1248 = vunpack.c.0.s8 %v1247
      %v1249 = vlaneseq
      %v1250 = vshrl.u32 %v1249, 7
      %v1251 = vsub.s32 %v1248, %v1250
      %v1252 = vrot.slane %v1238, %v1251
      %v1253 = vcombine.low %v1197, %v1229
      %v1254 = vcombine.high %v1197, %v1229
      %v1255 = vcombine.low %v1204, %v1236
      %v1256 = vcombine.high %v1204, %v1236
      %v1257 = vcombine.low %v1213, %v1245
      %v1258 = vcombine.high %v1213, %v1245
      %v1259 = vcombine.low %v1220, %v1252
      %v1260 = vcombine.high %v1220, %v1252
      %v1261 = vcombine.low %v1040, %v1064
      %v1262 = vcombine.high %v1040, %v1064
      %v1264 = vunpack.c.l.s4 1983009808
      %v1265 = vunpack.c.0.s8 %v1264
      %v1266 = vlaneseq
      %v1267 = vshrl.u32 %v1266, 7
      %v1268 = vsub.s32 %v1265, %v1267
      %v1269 = vrot.slane %v1261, %v1268
      %v1271 = vunpack.c.l.s4 1983009808
      %v1272 = vunpack.c.0.s8 %v1271
      %v1273 = vlaneseq
      %v1274 = vshrl.u32 %v1273, 7
      %v1275 = vsub.s32 %v1272, %v1274
      %v1276 = vrot.slane %v1262, %v1275
      %v1277 = vcombine.low %v1052, %v1076
      %v1278 = vcombine.high %v1052, %v1076
      %v1280 = vunpack.c.l.s4 1983009808
      %v1281 = vunpack.c.0.s8 %v1280
      %v1282 = vlaneseq
      %v1283 = vshrl.u32 %v1282, 7
      %v1284 = vsub.s32 %v1281, %v1283
      %v1285 = vrot.slane %v1277, %v1284
      %v1287 = vunpack.c.l.s4 1983009808
      %v1288 = vunpack.c.0.s8 %v1287
      %v1289 = vlaneseq
      %v1290 = vshrl.u32 %v1289, 7
      %v1291 = vsub.s32 %v1288, %v1290
      %v1292 = vrot.slane %v1278, %v1291
      %v1293 = vcombine.low %v1088, %v1112
      %v1294 = vcombine.high %v1088, %v1112
      %v1296 = vunpack.c.l.s4 1983009808
      %v1297 = vunpack.c.0.s8 %v1296
      %v1298 = vlaneseq
      %v1299 = vshrl.u32 %v1298, 7
      %v1300 = vsub.s32 %v1297, %v1299
      %v1301 = vrot.slane %v1293, %v1300
      %v1303 = vunpack.c.l.s4 1983009808
      %v1304 = vunpack.c.0.s8 %v1303
      %v1305 = vlaneseq
      %v1306 = vshrl.u32 %v1305, 7
      %v1307 = vsub.s32 %v1304, %v1306
      %v1308 = vrot.slane %v1294, %v1307
      %v1309 = vcombine.low %v1100, %v1124
      %v1310 = vcombine.high %v1100, %v1124
      %v1312 = vunpack.c.l.s4 1983009808
      %v1313 = vunpack.c.0.s8 %v1312
      %v1314 = vlaneseq
      %v1315 = vshrl.u32 %v1314, 7
      %v1316 = vsub.s32 %v1313, %v1315
      %v1317 = vrot.slane %v1309, %v1316
      %v1319 = vunpack.c.l.s4 1983009808
      %v1320 = vunpack.c.0.s8 %v1319
      %v1321 = vlaneseq
      %v1322 = vshrl.u32 %v1321, 7
      %v1323 = vsub.s32 %v1320, %v1322
      %v1324 = vrot.slane %v1310, %v1323
      %v1325 = vcombine.low %v1269, %v1285
      %v1326 = vcombine.high %v1269, %v1285
      %v1328 = vunpack.c.l.s4 1934713408
      %v1329 = vunpack.c.0.s8 %v1328
      %v1330 = vlaneseq
      %v1331 = vshrl.u32 %v1330, 7
      %v1332 = vsub.s32 %v1329, %v1331
      %v1333 = vrot.slane %v1325, %v1332
      %v1335 = vunpack.c.l.s4 1934713408
      %v1336 = vunpack.c.0.s8 %v1335
      %v1337 = vlaneseq
      %v1338 = vshrl.u32 %v1337, 7
      %v1339 = vsub.s32 %v1336, %v1338
      %v1340 = vrot.slane %v1326, %v1339
      %v1341 = vcombine.low %v1276, %v1292
      %v1342 = vcombine.high %v1276, %v1292
      %v1344 = vunpack.c.l.s4 1934713408
      %v1345 = vunpack.c.0.s8 %v1344
      %v1346 = vlaneseq
      %v1347 = vshrl.u32 %v1346, 7
      %v1348 = vsub.s32 %v1345, %v1347
      %v1349 = vrot.slane %v1341, %v1348
      %v1351 = vunpack.c.l.s4 1934713408
      %v1352 = vunpack.c.0.s8 %v1351
      %v1353 = vlaneseq
      %v1354 = vshrl.u32 %v1353, 7
      %v1355 = vsub.s32 %v1352, %v1354
      %v1356 = vrot.slane %v1342, %v1355
      %v1357 = vcombine.low %v1301, %v1317
      %v1358 = vcombine.high %v1301, %v1317
      %v1360 = vunpack.c.l.s4 1934713408
      %v1361 = vunpack.c.0.s8 %v1360
      %v1362 = vlaneseq
      %v1363 = vshrl.u32 %v1362, 7
      %v1364 = vsub.s32 %v1361, %v1363
      %v1365 = vrot.slane %v1357, %v1364
      %v1367 = vunpack.c.l.s4 1934713408
      %v1368 = vunpack.c.0.s8 %v1367
      %v1369 = vlaneseq
      %v1370 = vshrl.u32 %v1369, 7
      %v1371 = vsub.s32 %v1368, %v1370
      %v1372 = vrot.slane %v1358, %v1371
      %v1373 = vcombine.low %v1308, %v1324
      %v1374 = vcombine.high %v1308, %v1324
      %v1376 = vunpack.c.l.s4 1934713408
      %v1377 = vunpack.c.0.s8 %v1376
      %v1378 = vlaneseq
      %v1379 = vshrl.u32 %v1378, 7
      %v1380 = vsub.s32 %v1377, %v1379
      %v1381 = vrot.slane %v1373, %v1380
      %v1383 = vunpack.c.l.s4 1934713408
      %v1384 = vunpack.c.0.s8 %v1383
      %v1385 = vlaneseq
      %v1386 = vshrl.u32 %v1385, 7
      %v1387 = vsub.s32 %v1384, %v1386
      %v1388 = vrot.slane %v1374, %v1387
      %v1389 = vcombine.low %v1333, %v1365
      %v1390 = vcombine.high %v1333, %v1365
      %v1391 = vcombine.low %v1340, %v1372
      %v1392 = vcombine.high %v1340, %v1372
      %v1393 = vcombine.low %v1349, %v1381
      %v1394 = vcombine.high %v1349, %v1381
      %v1395 = vcombine.low %v1356, %v1388
      %v1396 = vcombine.high %v1356, %v1388
      %1398 = vrot.lane.b32.xlu0 %v1254, 2
      %v1399 = vpop.permute.xlu0 %1398
      %1402 = vrot.lane.b32.xlu0 %v1255, 4
      %v1403 = vpop.permute.xlu0 %1402
      %1406 = vrot.lane.b32.xlu0 %v1256, 6
      %v1407 = vpop.permute.xlu0 %1406
      %1410 = vrot.lane.b32.xlu0 %v1257, 8
      %v1411 = vpop.permute.xlu0 %1410
      %1414 = vrot.lane.b32.xlu0 %v1258, 10
      %v1415 = vpop.permute.xlu0 %1414
      %1418 = vrot.lane.b32.xlu0 %v1259, 12
      %v1419 = vpop.permute.xlu0 %1418
      %1422 = vrot.lane.b32.xlu0 %v1260, 14
      %v1423 = vpop.permute.xlu0 %1422
      %1426 = vrot.lane.b32.xlu0 %v1389, 16
      %v1427 = vpop.permute.xlu0 %1426
      %1430 = vrot.lane.b32.xlu0 %v1390, 18
      %v1431 = vpop.permute.xlu0 %1430
      %1434 = vrot.lane.b32.xlu0 %v1391, 20
      %v1435 = vpop.permute.xlu0 %1434
      %1438 = vrot.lane.b32.xlu0 %v1392, 22
      %v1439 = vpop.permute.xlu0 %1438
      %1442 = vrot.lane.b32.xlu0 %v1393, 24
      %v1443 = vpop.permute.xlu0 %1442
      %1446 = vrot.lane.b32.xlu0 %v1394, 26
      %v1447 = vpop.permute.xlu0 %1446
      %1450 = vrot.lane.b32.xlu0 %v1395, 28
      %v1451 = vpop.permute.xlu0 %1450
      %1454 = vrot.lane.b32.xlu0 %v1396, 30
      %v1455 = vpop.permute.xlu0 %1454
      %v1457 = vsel %vm535, %v1253, %v1399
      %v1458 = vsel %vm537, %v1457, %v1403
      %v1459 = vsel %vm539, %v1458, %v1407
      %v1460 = vsel %vm541, %v1459, %v1411
      %v1461 = vsel %vm543, %v1460, %v1415
      %v1462 = vsel %vm545, %v1461, %v1419
      %v1463 = vsel %vm547, %v1462, %v1423
      %v1464 = vsel %vm549, %v1463, %v1427
      %v1465 = vsel %vm551, %v1464, %v1431
      %v1466 = vsel %vm553, %v1465, %v1435
      %v1467 = vsel %vm555, %v1466, %v1439
      %v1468 = vsel %vm557, %v1467, %v1443
      %v1469 = vsel %vm559, %v1468, %v1447
      %v1470 = vsel %vm561, %v1469, %v1451
      %v1471 = vsel %vm563, %v1470, %v1455
      %1472 = vst.msk [vmem:[%s113 + $0x8] sm:$0xff] %vm565, %v1471
      %1474 = vrot.lane.b32.xlu0 %v1471, 32
      %v1475 = vpop.permute.xlu0 %1474
      %1477 = vst.msk [vmem:[%s113 + $0x8] sm:$0xff] %vm571, %v1475
      %v1478 = vld [vmem:[%s108] sm:$0xff]
      %v1479 = vlaneseq
      %v1480 = vshrl.u32 %v1479, 7
      %v1481 = vsub.s32 0, %v1480
      %v1482 = vrot.slane %v1478, %v1481
      %s1484 = sor.u32 256, 48
      %1485 = vbcast.lane.b32.xlu0 %v1482, %s1484
      %v1486 = vpop.permute.xlu0 %1485
      %s1488 = sor.u32 256, 56
      %1489 = vbcast.lane.b32.xlu0 %v1482, %s1488
      %v1490 = vpop.permute.xlu0 %1489
      %v1491 = vlaneseq
      %v1492 = vshrl.u32 %v1491, 7
      %v1493 = vsub.s32 1, %v1492
      %v1494 = vrot.slane %v1478, %v1493
      %s1496 = sor.u32 256, 48
      %1497 = vbcast.lane.b32.xlu0 %v1494, %s1496
      %v1498 = vpop.permute.xlu0 %1497
      %s1500 = sor.u32 256, 56
      %1501 = vbcast.lane.b32.xlu0 %v1494, %s1500
      %v1502 = vpop.permute.xlu0 %1501
      %v1503 = vlaneseq
      %v1504 = vshrl.u32 %v1503, 7
      %v1505 = vsub.s32 2, %v1504
      %v1506 = vrot.slane %v1478, %v1505
      %s1508 = sor.u32 256, 48
      %1509 = vbcast.lane.b32.xlu0 %v1506, %s1508
      %v1510 = vpop.permute.xlu0 %1509
      %s1512 = sor.u32 256, 56
      %1513 = vbcast.lane.b32.xlu0 %v1506, %s1512
      %v1514 = vpop.permute.xlu0 %1513
      %v1515 = vlaneseq
      %v1516 = vshrl.u32 %v1515, 7
      %v1517 = vsub.s32 3, %v1516
      %v1518 = vrot.slane %v1478, %v1517
      %s1520 = sor.u32 256, 48
      %1521 = vbcast.lane.b32.xlu0 %v1518, %s1520
      %v1522 = vpop.permute.xlu0 %1521
      %s1524 = sor.u32 256, 56
      %1525 = vbcast.lane.b32.xlu0 %v1518, %s1524
      %v1526 = vpop.permute.xlu0 %1525
      %v1527 = vlaneseq
      %v1528 = vshrl.u32 %v1527, 7
      %v1529 = vsub.s32 4, %v1528
      %v1530 = vrot.slane %v1478, %v1529
      %s1532 = sor.u32 256, 48
      %1533 = vbcast.lane.b32.xlu0 %v1530, %s1532
      %v1534 = vpop.permute.xlu0 %1533
      %s1536 = sor.u32 256, 56
      %1537 = vbcast.lane.b32.xlu0 %v1530, %s1536
      %v1538 = vpop.permute.xlu0 %1537
      %v1539 = vlaneseq
      %v1540 = vshrl.u32 %v1539, 7
      %v1541 = vsub.s32 5, %v1540
      %v1542 = vrot.slane %v1478, %v1541
      %s1544 = sor.u32 256, 48
      %1545 = vbcast.lane.b32.xlu0 %v1542, %s1544
      %v1546 = vpop.permute.xlu0 %1545
      %s1548 = sor.u32 256, 56
      %1549 = vbcast.lane.b32.xlu0 %v1542, %s1548
      %v1550 = vpop.permute.xlu0 %1549
      %v1551 = vlaneseq
      %v1552 = vshrl.u32 %v1551, 7
      %v1553 = vsub.s32 6, %v1552
      %v1554 = vrot.slane %v1478, %v1553
      %s1556 = sor.u32 256, 48
      %1557 = vbcast.lane.b32.xlu0 %v1554, %s1556
      %v1558 = vpop.permute.xlu0 %1557
      %s1560 = sor.u32 256, 56
      %1561 = vbcast.lane.b32.xlu0 %v1554, %s1560
      %v1562 = vpop.permute.xlu0 %1561
      %v1563 = vlaneseq
      %v1564 = vshrl.u32 %v1563, 7
      %v1565 = vsub.s32 7, %v1564
      %v1566 = vrot.slane %v1478, %v1565
      %s1568 = sor.u32 256, 48
      %1569 = vbcast.lane.b32.xlu0 %v1566, %s1568
      %v1570 = vpop.permute.xlu0 %1569
      %s1572 = sor.u32 256, 56
      %1573 = vbcast.lane.b32.xlu0 %v1566, %s1572
      %v1574 = vpop.permute.xlu0 %1573
      %v1575 = vcombine.low %v1486, %v1510
      %v1576 = vcombine.high %v1486, %v1510
      %v1578 = vunpack.c.l.s4 1983009808
      %v1579 = vunpack.c.0.s8 %v1578
      %v1580 = vlaneseq
      %v1581 = vshrl.u32 %v1580, 7
      %v1582 = vsub.s32 %v1579, %v1581
      %v1583 = vrot.slane %v1575, %v1582
      %v1585 = vunpack.c.l.s4 1983009808
      %v1586 = vunpack.c.0.s8 %v1585
      %v1587 = vlaneseq
      %v1588 = vshrl.u32 %v1587, 7
      %v1589 = vsub.s32 %v1586, %v1588
      %v1590 = vrot.slane %v1576, %v1589
      %v1591 = vcombine.low %v1498, %v1522
      %v1592 = vcombine.high %v1498, %v1522
      %v1594 = vunpack.c.l.s4 1983009808
      %v1595 = vunpack.c.0.s8 %v1594
      %v1596 = vlaneseq
      %v1597 = vshrl.u32 %v1596, 7
      %v1598 = vsub.s32 %v1595, %v1597
      %v1599 = vrot.slane %v1591, %v1598
      %v1601 = vunpack.c.l.s4 1983009808
      %v1602 = vunpack.c.0.s8 %v1601
      %v1603 = vlaneseq
      %v1604 = vshrl.u32 %v1603, 7
      %v1605 = vsub.s32 %v1602, %v1604
      %v1606 = vrot.slane %v1592, %v1605
      %v1607 = vcombine.low %v1534, %v1558
      %v1608 = vcombine.high %v1534, %v1558
      %v1610 = vunpack.c.l.s4 1983009808
      %v1611 = vunpack.c.0.s8 %v1610
      %v1612 = vlaneseq
      %v1613 = vshrl.u32 %v1612, 7
      %v1614 = vsub.s32 %v1611, %v1613
      %v1615 = vrot.slane %v1607, %v1614
      %v1617 = vunpack.c.l.s4 1983009808
      %v1618 = vunpack.c.0.s8 %v1617
      %v1619 = vlaneseq
      %v1620 = vshrl.u32 %v1619, 7
      %v1621 = vsub.s32 %v1618, %v1620
      %v1622 = vrot.slane %v1608, %v1621
      %v1623 = vcombine.low %v1546, %v1570
      %v1624 = vcombine.high %v1546, %v1570
      %v1626 = vunpack.c.l.s4 1983009808
      %v1627 = vunpack.c.0.s8 %v1626
      %v1628 = vlaneseq
      %v1629 = vshrl.u32 %v1628, 7
      %v1630 = vsub.s32 %v1627, %v1629
      %v1631 = vrot.slane %v1623, %v1630
      %v1633 = vunpack.c.l.s4 1983009808
      %v1634 = vunpack.c.0.s8 %v1633
      %v1635 = vlaneseq
      %v1636 = vshrl.u32 %v1635, 7
      %v1637 = vsub.s32 %v1634, %v1636
      %v1638 = vrot.slane %v1624, %v1637
      %v1639 = vcombine.low %v1583, %v1599
      %v1640 = vcombine.high %v1583, %v1599
      %v1642 = vunpack.c.l.s4 1934713408
      %v1643 = vunpack.c.0.s8 %v1642
      %v1644 = vlaneseq
      %v1645 = vshrl.u32 %v1644, 7
      %v1646 = vsub.s32 %v1643, %v1645
      %v1647 = vrot.slane %v1639, %v1646
      %v1649 = vunpack.c.l.s4 1934713408
      %v1650 = vunpack.c.0.s8 %v1649
      %v1651 = vlaneseq
      %v1652 = vshrl.u32 %v1651, 7
      %v1653 = vsub.s32 %v1650, %v1652
      %v1654 = vrot.slane %v1640, %v1653
      %v1655 = vcombine.low %v1590, %v1606
      %v1656 = vcombine.high %v1590, %v1606
      %v1658 = vunpack.c.l.s4 1934713408
      %v1659 = vunpack.c.0.s8 %v1658
      %v1660 = vlaneseq
      %v1661 = vshrl.u32 %v1660, 7
      %v1662 = vsub.s32 %v1659, %v1661
      %v1663 = vrot.slane %v1655, %v1662
      %v1665 = vunpack.c.l.s4 1934713408
      %v1666 = vunpack.c.0.s8 %v1665
      %v1667 = vlaneseq
      %v1668 = vshrl.u32 %v1667, 7
      %v1669 = vsub.s32 %v1666, %v1668
      %v1670 = vrot.slane %v1656, %v1669
      %v1671 = vcombine.low %v1615, %v1631
      %v1672 = vcombine.high %v1615, %v1631
      %v1674 = vunpack.c.l.s4 1934713408
      %v1675 = vunpack.c.0.s8 %v1674
      %v1676 = vlaneseq
      %v1677 = vshrl.u32 %v1676, 7
      %v1678 = vsub.s32 %v1675, %v1677
      %v1679 = vrot.slane %v1671, %v1678
      %v1681 = vunpack.c.l.s4 1934713408
      %v1682 = vunpack.c.0.s8 %v1681
      %v1683 = vlaneseq
      %v1684 = vshrl.u32 %v1683, 7
      %v1685 = vsub.s32 %v1682, %v1684
      %v1686 = vrot.slane %v1672, %v1685
      %v1687 = vcombine.low %v1622, %v1638
      %v1688 = vcombine.high %v1622, %v1638
      %v1690 = vunpack.c.l.s4 1934713408
      %v1691 = vunpack.c.0.s8 %v1690
      %v1692 = vlaneseq
      %v1693 = vshrl.u32 %v1692, 7
      %v1694 = vsub.s32 %v1691, %v1693
      %v1695 = vrot.slane %v1687, %v1694
      %v1697 = vunpack.c.l.s4 1934713408
      %v1698 = vunpack.c.0.s8 %v1697
      %v1699 = vlaneseq
      %v1700 = vshrl.u32 %v1699, 7
      %v1701 = vsub.s32 %v1698, %v1700
      %v1702 = vrot.slane %v1688, %v1701
      %v1703 = vcombine.low %v1647, %v1679
      %v1704 = vcombine.high %v1647, %v1679
      %v1705 = vcombine.low %v1654, %v1686
      %v1706 = vcombine.high %v1654, %v1686
      %v1707 = vcombine.low %v1663, %v1695
      %v1708 = vcombine.high %v1663, %v1695
      %v1709 = vcombine.low %v1670, %v1702
      %v1710 = vcombine.high %v1670, %v1702
      %v1711 = vcombine.low %v1490, %v1514
      %v1712 = vcombine.high %v1490, %v1514
      %v1714 = vunpack.c.l.s4 1983009808
      %v1715 = vunpack.c.0.s8 %v1714
      %v1716 = vlaneseq
      %v1717 = vshrl.u32 %v1716, 7
      %v1718 = vsub.s32 %v1715, %v1717
      %v1719 = vrot.slane %v1711, %v1718
      %v1721 = vunpack.c.l.s4 1983009808
      %v1722 = vunpack.c.0.s8 %v1721
      %v1723 = vlaneseq
      %v1724 = vshrl.u32 %v1723, 7
      %v1725 = vsub.s32 %v1722, %v1724
      %v1726 = vrot.slane %v1712, %v1725
      %v1727 = vcombine.low %v1502, %v1526
      %v1728 = vcombine.high %v1502, %v1526
      %v1730 = vunpack.c.l.s4 1983009808
      %v1731 = vunpack.c.0.s8 %v1730
      %v1732 = vlaneseq
      %v1733 = vshrl.u32 %v1732, 7
      %v1734 = vsub.s32 %v1731, %v1733
      %v1735 = vrot.slane %v1727, %v1734
      %v1737 = vunpack.c.l.s4 1983009808
      %v1738 = vunpack.c.0.s8 %v1737
      %v1739 = vlaneseq
      %v1740 = vshrl.u32 %v1739, 7
      %v1741 = vsub.s32 %v1738, %v1740
      %v1742 = vrot.slane %v1728, %v1741
      %v1743 = vcombine.low %v1538, %v1562
      %v1744 = vcombine.high %v1538, %v1562
      %v1746 = vunpack.c.l.s4 1983009808
      %v1747 = vunpack.c.0.s8 %v1746
      %v1748 = vlaneseq
      %v1749 = vshrl.u32 %v1748, 7
      %v1750 = vsub.s32 %v1747, %v1749
      %v1751 = vrot.slane %v1743, %v1750
      %v1753 = vunpack.c.l.s4 1983009808
      %v1754 = vunpack.c.0.s8 %v1753
      %v1755 = vlaneseq
      %v1756 = vshrl.u32 %v1755, 7
      %v1757 = vsub.s32 %v1754, %v1756
      %v1758 = vrot.slane %v1744, %v1757
      %v1759 = vcombine.low %v1550, %v1574
      %v1760 = vcombine.high %v1550, %v1574
      %v1762 = vunpack.c.l.s4 1983009808
      %v1763 = vunpack.c.0.s8 %v1762
      %v1764 = vlaneseq
      %v1765 = vshrl.u32 %v1764, 7
      %v1766 = vsub.s32 %v1763, %v1765
      %v1767 = vrot.slane %v1759, %v1766
      %v1769 = vunpack.c.l.s4 1983009808
      %v1770 = vunpack.c.0.s8 %v1769
      %v1771 = vlaneseq
      %v1772 = vshrl.u32 %v1771, 7
      %v1773 = vsub.s32 %v1770, %v1772
      %v1774 = vrot.slane %v1760, %v1773
      %v1775 = vcombine.low %v1719, %v1735
      %v1776 = vcombine.high %v1719, %v1735
      %v1778 = vunpack.c.l.s4 1934713408
      %v1779 = vunpack.c.0.s8 %v1778
      %v1780 = vlaneseq
      %v1781 = vshrl.u32 %v1780, 7
      %v1782 = vsub.s32 %v1779, %v1781
      %v1783 = vrot.slane %v1775, %v1782
      %v1785 = vunpack.c.l.s4 1934713408
      %v1786 = vunpack.c.0.s8 %v1785
      %v1787 = vlaneseq
      %v1788 = vshrl.u32 %v1787, 7
      %v1789 = vsub.s32 %v1786, %v1788
      %v1790 = vrot.slane %v1776, %v1789
      %v1791 = vcombine.low %v1726, %v1742
      %v1792 = vcombine.high %v1726, %v1742
      %v1794 = vunpack.c.l.s4 1934713408
      %v1795 = vunpack.c.0.s8 %v1794
      %v1796 = vlaneseq
      %v1797 = vshrl.u32 %v1796, 7
      %v1798 = vsub.s32 %v1795, %v1797
      %v1799 = vrot.slane %v1791, %v1798
      %v1801 = vunpack.c.l.s4 1934713408
      %v1802 = vunpack.c.0.s8 %v1801
      %v1803 = vlaneseq
      %v1804 = vshrl.u32 %v1803, 7
      %v1805 = vsub.s32 %v1802, %v1804
      %v1806 = vrot.slane %v1792, %v1805
      %v1807 = vcombine.low %v1751, %v1767
      %v1808 = vcombine.high %v1751, %v1767
      %v1810 = vunpack.c.l.s4 1934713408
      %v1811 = vunpack.c.0.s8 %v1810
      %v1812 = vlaneseq
      %v1813 = vshrl.u32 %v1812, 7
      %v1814 = vsub.s32 %v1811, %v1813
      %v1815 = vrot.slane %v1807, %v1814
      %v1817 = vunpack.c.l.s4 1934713408
      %v1818 = vunpack.c.0.s8 %v1817
      %v1819 = vlaneseq
      %v1820 = vshrl.u32 %v1819, 7
      %v1821 = vsub.s32 %v1818, %v1820
      %v1822 = vrot.slane %v1808, %v1821
      %v1823 = vcombine.low %v1758, %v1774
      %v1824 = vcombine.high %v1758, %v1774
      %v1826 = vunpack.c.l.s4 1934713408
      %v1827 = vunpack.c.0.s8 %v1826
      %v1828 = vlaneseq
      %v1829 = vshrl.u32 %v1828, 7
      %v1830 = vsub.s32 %v1827, %v1829
      %v1831 = vrot.slane %v1823, %v1830
      %v1833 = vunpack.c.l.s4 1934713408
      %v1834 = vunpack.c.0.s8 %v1833
      %v1835 = vlaneseq
      %v1836 = vshrl.u32 %v1835, 7
      %v1837 = vsub.s32 %v1834, %v1836
      %v1838 = vrot.slane %v1824, %v1837
      %v1839 = vcombine.low %v1783, %v1815
      %v1840 = vcombine.high %v1783, %v1815
      %v1841 = vcombine.low %v1790, %v1822
      %v1842 = vcombine.high %v1790, %v1822
      %v1843 = vcombine.low %v1799, %v1831
      %v1844 = vcombine.high %v1799, %v1831
      %v1845 = vcombine.low %v1806, %v1838
      %v1846 = vcombine.high %v1806, %v1838
      %1848 = vrot.lane.b32.xlu0 %v1704, 2
      %v1849 = vpop.permute.xlu0 %1848
      %1852 = vrot.lane.b32.xlu0 %v1705, 4
      %v1853 = vpop.permute.xlu0 %1852
      %1856 = vrot.lane.b32.xlu0 %v1706, 6
      %v1857 = vpop.permute.xlu0 %1856
      %1860 = vrot.lane.b32.xlu0 %v1707, 8
      %v1861 = vpop.permute.xlu0 %1860
      %1864 = vrot.lane.b32.xlu0 %v1708, 10
      %v1865 = vpop.permute.xlu0 %1864
      %1868 = vrot.lane.b32.xlu0 %v1709, 12
      %v1869 = vpop.permute.xlu0 %1868
      %1872 = vrot.lane.b32.xlu0 %v1710, 14
      %v1873 = vpop.permute.xlu0 %1872
      %1876 = vrot.lane.b32.xlu0 %v1839, 16
      %v1877 = vpop.permute.xlu0 %1876
      %1880 = vrot.lane.b32.xlu0 %v1840, 18
      %v1881 = vpop.permute.xlu0 %1880
      %1884 = vrot.lane.b32.xlu0 %v1841, 20
      %v1885 = vpop.permute.xlu0 %1884
      %1888 = vrot.lane.b32.xlu0 %v1842, 22
      %v1889 = vpop.permute.xlu0 %1888
      %1892 = vrot.lane.b32.xlu0 %v1843, 24
      %v1893 = vpop.permute.xlu0 %1892
      %1896 = vrot.lane.b32.xlu0 %v1844, 26
      %v1897 = vpop.permute.xlu0 %1896
      %1900 = vrot.lane.b32.xlu0 %v1845, 28
      %v1901 = vpop.permute.xlu0 %1900
      %1904 = vrot.lane.b32.xlu0 %v1846, 30
      %v1905 = vpop.permute.xlu0 %1904
      %v1907 = vsel %vm535, %v1703, %v1849
      %v1908 = vsel %vm537, %v1907, %v1853
      %v1909 = vsel %vm539, %v1908, %v1857
      %v1910 = vsel %vm541, %v1909, %v1861
      %v1911 = vsel %vm543, %v1910, %v1865
      %v1912 = vsel %vm545, %v1911, %v1869
      %v1913 = vsel %vm547, %v1912, %v1873
      %v1914 = vsel %vm549, %v1913, %v1877
      %v1915 = vsel %vm551, %v1914, %v1881
      %v1916 = vsel %vm553, %v1915, %v1885
      %v1917 = vsel %vm555, %v1916, %v1889
      %v1918 = vsel %vm557, %v1917, %v1893
      %v1919 = vsel %vm559, %v1918, %v1897
      %v1920 = vsel %vm561, %v1919, %v1901
      %v1921 = vsel %vm563, %v1920, %v1905
      %1923 = vrot.lane.b32.xlu0 %v1921, 64
      %v1924 = vpop.permute.xlu0 %1923
      %1926 = vst.msk [vmem:[%s113 + $0x8] sm:$0xff] %vm1021, %v1924
      %1927 = vrot.lane.b32.xlu0 %v1921, 96
      %v1928 = vpop.permute.xlu0 %1927
      %1930 = vst.msk [vmem:[%s113 + $0x8] sm:$0xff] %vm1026, %v1928
      %v1931 = vld [vmem:[%s108] sm:$0xff]
      %v1932 = vlaneseq
      %v1933 = vshrl.u32 %v1932, 7
      %v1934 = vsub.s32 0, %v1933
      %v1935 = vrot.slane %v1931, %v1934
      %s1937 = sor.u32 256, 64
      %1938 = vbcast.lane.b32.xlu0 %v1935, %s1937
      %v1939 = vpop.permute.xlu0 %1938
      %s1941 = sor.u32 256, 72
      %1942 = vbcast.lane.b32.xlu0 %v1935, %s1941
      %v1943 = vpop.permute.xlu0 %1942
      %v1944 = vlaneseq
      %v1945 = vshrl.u32 %v1944, 7
      %v1946 = vsub.s32 1, %v1945
      %v1947 = vrot.slane %v1931, %v1946
      %s1949 = sor.u32 256, 64
      %1950 = vbcast.lane.b32.xlu0 %v1947, %s1949
      %v1951 = vpop.permute.xlu0 %1950
      %s1953 = sor.u32 256, 72
      %1954 = vbcast.lane.b32.xlu0 %v1947, %s1953
      %v1955 = vpop.permute.xlu0 %1954
      %v1956 = vlaneseq
      %v1957 = vshrl.u32 %v1956, 7
      %v1958 = vsub.s32 2, %v1957
      %v1959 = vrot.slane %v1931, %v1958
      %s1961 = sor.u32 256, 64
      %1962 = vbcast.lane.b32.xlu0 %v1959, %s1961
      %v1963 = vpop.permute.xlu0 %1962
      %s1965 = sor.u32 256, 72
      %1966 = vbcast.lane.b32.xlu0 %v1959, %s1965
      %v1967 = vpop.permute.xlu0 %1966
      %v1968 = vlaneseq
      %v1969 = vshrl.u32 %v1968, 7
      %v1970 = vsub.s32 3, %v1969
      %v1971 = vrot.slane %v1931, %v1970
      %s1973 = sor.u32 256, 64
      %1974 = vbcast.lane.b32.xlu0 %v1971, %s1973
      %v1975 = vpop.permute.xlu0 %1974
      %s1977 = sor.u32 256, 72
      %1978 = vbcast.lane.b32.xlu0 %v1971, %s1977
      %v1979 = vpop.permute.xlu0 %1978
      %v1980 = vlaneseq
      %v1981 = vshrl.u32 %v1980, 7
      %v1982 = vsub.s32 4, %v1981
      %v1983 = vrot.slane %v1931, %v1982
      %s1985 = sor.u32 256, 64
      %1986 = vbcast.lane.b32.xlu0 %v1983, %s1985
      %v1987 = vpop.permute.xlu0 %1986
      %s1989 = sor.u32 256, 72
      %1990 = vbcast.lane.b32.xlu0 %v1983, %s1989
      %v1991 = vpop.permute.xlu0 %1990
      %v1992 = vlaneseq
      %v1993 = vshrl.u32 %v1992, 7
      %v1994 = vsub.s32 5, %v1993
      %v1995 = vrot.slane %v1931, %v1994
      %s1997 = sor.u32 256, 64
      %1998 = vbcast.lane.b32.xlu0 %v1995, %s1997
      %v1999 = vpop.permute.xlu0 %1998
      %s2001 = sor.u32 256, 72
      %2002 = vbcast.lane.b32.xlu0 %v1995, %s2001
      %v2003 = vpop.permute.xlu0 %2002
      %v2004 = vlaneseq
      %v2005 = vshrl.u32 %v2004, 7
      %v2006 = vsub.s32 6, %v2005
      %v2007 = vrot.slane %v1931, %v2006
      %s2009 = sor.u32 256, 64
      %2010 = vbcast.lane.b32.xlu0 %v2007, %s2009
      %v2011 = vpop.permute.xlu0 %2010
      %s2013 = sor.u32 256, 72
      %2014 = vbcast.lane.b32.xlu0 %v2007, %s2013
      %v2015 = vpop.permute.xlu0 %2014
      %v2016 = vlaneseq
      %v2017 = vshrl.u32 %v2016, 7
      %v2018 = vsub.s32 7, %v2017
      %v2019 = vrot.slane %v1931, %v2018
      %s2021 = sor.u32 256, 64
      %2022 = vbcast.lane.b32.xlu0 %v2019, %s2021
      %v2023 = vpop.permute.xlu0 %2022
      %s2025 = sor.u32 256, 72
      %2026 = vbcast.lane.b32.xlu0 %v2019, %s2025
      %v2027 = vpop.permute.xlu0 %2026
      %v2028 = vcombine.low %v1939, %v1963
      %v2029 = vcombine.high %v1939, %v1963
      %v2031 = vunpack.c.l.s4 1983009808
      %v2032 = vunpack.c.0.s8 %v2031
      %v2033 = vlaneseq
      %v2034 = vshrl.u32 %v2033, 7
      %v2035 = vsub.s32 %v2032, %v2034
      %v2036 = vrot.slane %v2028, %v2035
      %v2038 = vunpack.c.l.s4 1983009808
      %v2039 = vunpack.c.0.s8 %v2038
      %v2040 = vlaneseq
      %v2041 = vshrl.u32 %v2040, 7
      %v2042 = vsub.s32 %v2039, %v2041
      %v2043 = vrot.slane %v2029, %v2042
      %v2044 = vcombine.low %v1951, %v1975
      %v2045 = vcombine.high %v1951, %v1975
      %v2047 = vunpack.c.l.s4 1983009808
      %v2048 = vunpack.c.0.s8 %v2047
      %v2049 = vlaneseq
      %v2050 = vshrl.u32 %v2049, 7
      %v2051 = vsub.s32 %v2048, %v2050
      %v2052 = vrot.slane %v2044, %v2051
      %v2054 = vunpack.c.l.s4 1983009808
      %v2055 = vunpack.c.0.s8 %v2054
      %v2056 = vlaneseq
      %v2057 = vshrl.u32 %v2056, 7
      %v2058 = vsub.s32 %v2055, %v2057
      %v2059 = vrot.slane %v2045, %v2058
      %v2060 = vcombine.low %v1987, %v2011
      %v2061 = vcombine.high %v1987, %v2011
      %v2063 = vunpack.c.l.s4 1983009808
      %v2064 = vunpack.c.0.s8 %v2063
      %v2065 = vlaneseq
      %v2066 = vshrl.u32 %v2065, 7
      %v2067 = vsub.s32 %v2064, %v2066
      %v2068 = vrot.slane %v2060, %v2067
      %v2070 = vunpack.c.l.s4 1983009808
      %v2071 = vunpack.c.0.s8 %v2070
      %v2072 = vlaneseq
      %v2073 = vshrl.u32 %v2072, 7
      %v2074 = vsub.s32 %v2071, %v2073
      %v2075 = vrot.slane %v2061, %v2074
      %v2076 = vcombine.low %v1999, %v2023
      %v2077 = vcombine.high %v1999, %v2023
      %v2079 = vunpack.c.l.s4 1983009808
      %v2080 = vunpack.c.0.s8 %v2079
      %v2081 = vlaneseq
      %v2082 = vshrl.u32 %v2081, 7
      %v2083 = vsub.s32 %v2080, %v2082
      %v2084 = vrot.slane %v2076, %v2083
      %v2086 = vunpack.c.l.s4 1983009808
      %v2087 = vunpack.c.0.s8 %v2086
      %v2088 = vlaneseq
      %v2089 = vshrl.u32 %v2088, 7
      %v2090 = vsub.s32 %v2087, %v2089
      %v2091 = vrot.slane %v2077, %v2090
      %v2092 = vcombine.low %v2036, %v2052
      %v2093 = vcombine.high %v2036, %v2052
      %v2095 = vunpack.c.l.s4 1934713408
      %v2096 = vunpack.c.0.s8 %v2095
      %v2097 = vlaneseq
      %v2098 = vshrl.u32 %v2097, 7
      %v2099 = vsub.s32 %v2096, %v2098
      %v2100 = vrot.slane %v2092, %v2099
      %v2102 = vunpack.c.l.s4 1934713408
      %v2103 = vunpack.c.0.s8 %v2102
      %v2104 = vlaneseq
      %v2105 = vshrl.u32 %v2104, 7
      %v2106 = vsub.s32 %v2103, %v2105
      %v2107 = vrot.slane %v2093, %v2106
      %v2108 = vcombine.low %v2043, %v2059
      %v2109 = vcombine.high %v2043, %v2059
      %v2111 = vunpack.c.l.s4 1934713408
      %v2112 = vunpack.c.0.s8 %v2111
      %v2113 = vlaneseq
      %v2114 = vshrl.u32 %v2113, 7
      %v2115 = vsub.s32 %v2112, %v2114
      %v2116 = vrot.slane %v2108, %v2115
      %v2118 = vunpack.c.l.s4 1934713408
      %v2119 = vunpack.c.0.s8 %v2118
      %v2120 = vlaneseq
      %v2121 = vshrl.u32 %v2120, 7
      %v2122 = vsub.s32 %v2119, %v2121
      %v2123 = vrot.slane %v2109, %v2122
      %v2124 = vcombine.low %v2068, %v2084
      %v2125 = vcombine.high %v2068, %v2084
      %v2127 = vunpack.c.l.s4 1934713408
      %v2128 = vunpack.c.0.s8 %v2127
      %v2129 = vlaneseq
      %v2130 = vshrl.u32 %v2129, 7
      %v2131 = vsub.s32 %v2128, %v2130
      %v2132 = vrot.slane %v2124, %v2131
      %v2134 = vunpack.c.l.s4 1934713408
      %v2135 = vunpack.c.0.s8 %v2134
      %v2136 = vlaneseq
      %v2137 = vshrl.u32 %v2136, 7
      %v2138 = vsub.s32 %v2135, %v2137
      %v2139 = vrot.slane %v2125, %v2138
      %v2140 = vcombine.low %v2075, %v2091
      %v2141 = vcombine.high %v2075, %v2091
      %v2143 = vunpack.c.l.s4 1934713408
      %v2144 = vunpack.c.0.s8 %v2143
      %v2145 = vlaneseq
      %v2146 = vshrl.u32 %v2145, 7
      %v2147 = vsub.s32 %v2144, %v2146
      %v2148 = vrot.slane %v2140, %v2147
      %v2150 = vunpack.c.l.s4 1934713408
      %v2151 = vunpack.c.0.s8 %v2150
      %v2152 = vlaneseq
      %v2153 = vshrl.u32 %v2152, 7
      %v2154 = vsub.s32 %v2151, %v2153
      %v2155 = vrot.slane %v2141, %v2154
      %v2156 = vcombine.low %v2100, %v2132
      %v2157 = vcombine.high %v2100, %v2132
      %v2158 = vcombine.low %v2107, %v2139
      %v2159 = vcombine.high %v2107, %v2139
      %v2160 = vcombine.low %v2116, %v2148
      %v2161 = vcombine.high %v2116, %v2148
      %v2162 = vcombine.low %v2123, %v2155
      %v2163 = vcombine.high %v2123, %v2155
      %v2164 = vcombine.low %v1943, %v1967
      %v2165 = vcombine.high %v1943, %v1967
      %v2167 = vunpack.c.l.s4 1983009808
      %v2168 = vunpack.c.0.s8 %v2167
      %v2169 = vlaneseq
      %v2170 = vshrl.u32 %v2169, 7
      %v2171 = vsub.s32 %v2168, %v2170
      %v2172 = vrot.slane %v2164, %v2171
      %v2174 = vunpack.c.l.s4 1983009808
      %v2175 = vunpack.c.0.s8 %v2174
      %v2176 = vlaneseq
      %v2177 = vshrl.u32 %v2176, 7
      %v2178 = vsub.s32 %v2175, %v2177
      %v2179 = vrot.slane %v2165, %v2178
      %v2180 = vcombine.low %v1955, %v1979
      %v2181 = vcombine.high %v1955, %v1979
      %v2183 = vunpack.c.l.s4 1983009808
      %v2184 = vunpack.c.0.s8 %v2183
      %v2185 = vlaneseq
      %v2186 = vshrl.u32 %v2185, 7
      %v2187 = vsub.s32 %v2184, %v2186
      %v2188 = vrot.slane %v2180, %v2187
      %v2190 = vunpack.c.l.s4 1983009808
      %v2191 = vunpack.c.0.s8 %v2190
      %v2192 = vlaneseq
      %v2193 = vshrl.u32 %v2192, 7
      %v2194 = vsub.s32 %v2191, %v2193
      %v2195 = vrot.slane %v2181, %v2194
      %v2196 = vcombine.low %v1991, %v2015
      %v2197 = vcombine.high %v1991, %v2015
      %v2199 = vunpack.c.l.s4 1983009808
      %v2200 = vunpack.c.0.s8 %v2199
      %v2201 = vlaneseq
      %v2202 = vshrl.u32 %v2201, 7
      %v2203 = vsub.s32 %v2200, %v2202
      %v2204 = vrot.slane %v2196, %v2203
      %v2206 = vunpack.c.l.s4 1983009808
      %v2207 = vunpack.c.0.s8 %v2206
      %v2208 = vlaneseq
      %v2209 = vshrl.u32 %v2208, 7
      %v2210 = vsub.s32 %v2207, %v2209
      %v2211 = vrot.slane %v2197, %v2210
      %v2212 = vcombine.low %v2003, %v2027
      %v2213 = vcombine.high %v2003, %v2027
      %v2215 = vunpack.c.l.s4 1983009808
      %v2216 = vunpack.c.0.s8 %v2215
      %v2217 = vlaneseq
      %v2218 = vshrl.u32 %v2217, 7
      %v2219 = vsub.s32 %v2216, %v2218
      %v2220 = vrot.slane %v2212, %v2219
      %v2222 = vunpack.c.l.s4 1983009808
      %v2223 = vunpack.c.0.s8 %v2222
      %v2224 = vlaneseq
      %v2225 = vshrl.u32 %v2224, 7
      %v2226 = vsub.s32 %v2223, %v2225
      %v2227 = vrot.slane %v2213, %v2226
      %v2228 = vcombine.low %v2172, %v2188
      %v2229 = vcombine.high %v2172, %v2188
      %v2231 = vunpack.c.l.s4 1934713408
      %v2232 = vunpack.c.0.s8 %v2231
      %v2233 = vlaneseq
      %v2234 = vshrl.u32 %v2233, 7
      %v2235 = vsub.s32 %v2232, %v2234
      %v2236 = vrot.slane %v2228, %v2235
      %v2238 = vunpack.c.l.s4 1934713408
      %v2239 = vunpack.c.0.s8 %v2238
      %v2240 = vlaneseq
      %v2241 = vshrl.u32 %v2240, 7
      %v2242 = vsub.s32 %v2239, %v2241
      %v2243 = vrot.slane %v2229, %v2242
      %v2244 = vcombine.low %v2179, %v2195
      %v2245 = vcombine.high %v2179, %v2195
      %v2247 = vunpack.c.l.s4 1934713408
      %v2248 = vunpack.c.0.s8 %v2247
      %v2249 = vlaneseq
      %v2250 = vshrl.u32 %v2249, 7
      %v2251 = vsub.s32 %v2248, %v2250
      %v2252 = vrot.slane %v2244, %v2251
      %v2254 = vunpack.c.l.s4 1934713408
      %v2255 = vunpack.c.0.s8 %v2254
      %v2256 = vlaneseq
      %v2257 = vshrl.u32 %v2256, 7
      %v2258 = vsub.s32 %v2255, %v2257
      %v2259 = vrot.slane %v2245, %v2258
      %v2260 = vcombine.low %v2204, %v2220
      %v2261 = vcombine.high %v2204, %v2220
      %v2263 = vunpack.c.l.s4 1934713408
      %v2264 = vunpack.c.0.s8 %v2263
      %v2265 = vlaneseq
      %v2266 = vshrl.u32 %v2265, 7
      %v2267 = vsub.s32 %v2264, %v2266
      %v2268 = vrot.slane %v2260, %v2267
      %v2270 = vunpack.c.l.s4 1934713408
      %v2271 = vunpack.c.0.s8 %v2270
      %v2272 = vlaneseq
      %v2273 = vshrl.u32 %v2272, 7
      %v2274 = vsub.s32 %v2271, %v2273
      %v2275 = vrot.slane %v2261, %v2274
      %v2276 = vcombine.low %v2211, %v2227
      %v2277 = vcombine.high %v2211, %v2227
      %v2279 = vunpack.c.l.s4 1934713408
      %v2280 = vunpack.c.0.s8 %v2279
      %v2281 = vlaneseq
      %v2282 = vshrl.u32 %v2281, 7
      %v2283 = vsub.s32 %v2280, %v2282
      %v2284 = vrot.slane %v2276, %v2283
      %v2286 = vunpack.c.l.s4 1934713408
      %v2287 = vunpack.c.0.s8 %v2286
      %v2288 = vlaneseq
      %v2289 = vshrl.u32 %v2288, 7
      %v2290 = vsub.s32 %v2287, %v2289
      %v2291 = vrot.slane %v2277, %v2290
      %v2292 = vcombine.low %v2236, %v2268
      %v2293 = vcombine.high %v2236, %v2268
      %v2294 = vcombine.low %v2243, %v2275
      %v2295 = vcombine.high %v2243, %v2275
      %v2296 = vcombine.low %v2252, %v2284
      %v2297 = vcombine.high %v2252, %v2284
      %v2298 = vcombine.low %v2259, %v2291
      %v2299 = vcombine.high %v2259, %v2291
      %2301 = vrot.lane.b32.xlu0 %v2157, 2
      %v2302 = vpop.permute.xlu0 %2301
      %2305 = vrot.lane.b32.xlu0 %v2158, 4
      %v2306 = vpop.permute.xlu0 %2305
      %2309 = vrot.lane.b32.xlu0 %v2159, 6
      %v2310 = vpop.permute.xlu0 %2309
      %2313 = vrot.lane.b32.xlu0 %v2160, 8
      %v2314 = vpop.permute.xlu0 %2313
      %2317 = vrot.lane.b32.xlu0 %v2161, 10
      %v2318 = vpop.permute.xlu0 %2317
      %2321 = vrot.lane.b32.xlu0 %v2162, 12
      %v2322 = vpop.permute.xlu0 %2321
      %2325 = vrot.lane.b32.xlu0 %v2163, 14
      %v2326 = vpop.permute.xlu0 %2325
      %2329 = vrot.lane.b32.xlu0 %v2292, 16
      %v2330 = vpop.permute.xlu0 %2329
      %2333 = vrot.lane.b32.xlu0 %v2293, 18
      %v2334 = vpop.permute.xlu0 %2333
      %2337 = vrot.lane.b32.xlu0 %v2294, 20
      %v2338 = vpop.permute.xlu0 %2337
      %2341 = vrot.lane.b32.xlu0 %v2295, 22
      %v2342 = vpop.permute.xlu0 %2341
      %2345 = vrot.lane.b32.xlu0 %v2296, 24
      %v2346 = vpop.permute.xlu0 %2345
      %2349 = vrot.lane.b32.xlu0 %v2297, 26
      %v2350 = vpop.permute.xlu0 %2349
      %2353 = vrot.lane.b32.xlu0 %v2298, 28
      %v2354 = vpop.permute.xlu0 %2353
      %2357 = vrot.lane.b32.xlu0 %v2299, 30
      %v2358 = vpop.permute.xlu0 %2357
      %v2360 = vsel %vm535, %v2156, %v2302
      %v2361 = vsel %vm537, %v2360, %v2306
      %v2362 = vsel %vm539, %v2361, %v2310
      %v2363 = vsel %vm541, %v2362, %v2314
      %v2364 = vsel %vm543, %v2363, %v2318
      %v2365 = vsel %vm545, %v2364, %v2322
      %v2366 = vsel %vm547, %v2365, %v2326
      %v2367 = vsel %vm549, %v2366, %v2330
      %v2368 = vsel %vm551, %v2367, %v2334
      %v2369 = vsel %vm553, %v2368, %v2338
      %v2370 = vsel %vm555, %v2369, %v2342
      %v2371 = vsel %vm557, %v2370, %v2346
      %v2372 = vsel %vm559, %v2371, %v2350
      %v2373 = vsel %vm561, %v2372, %v2354
      %v2374 = vsel %vm563, %v2373, %v2358
      %2375 = vst.msk [vmem:[%s113 + $0x10] sm:$0xff] %vm565, %v2374
      %2377 = vrot.lane.b32.xlu0 %v2374, 32
      %v2378 = vpop.permute.xlu0 %2377
      %2380 = vst.msk [vmem:[%s113 + $0x10] sm:$0xff] %vm571, %v2378
      %v2381 = vld [vmem:[%s108] sm:$0xff]
      %v2382 = vlaneseq
      %v2383 = vshrl.u32 %v2382, 7
      %v2384 = vsub.s32 0, %v2383
      %v2385 = vrot.slane %v2381, %v2384
      %s2387 = sor.u32 256, 80
      %2388 = vbcast.lane.b32.xlu0 %v2385, %s2387
      %v2389 = vpop.permute.xlu0 %2388
      %s2391 = sor.u32 256, 88
      %2392 = vbcast.lane.b32.xlu0 %v2385, %s2391
      %v2393 = vpop.permute.xlu0 %2392
      %v2394 = vlaneseq
      %v2395 = vshrl.u32 %v2394, 7
      %v2396 = vsub.s32 1, %v2395
      %v2397 = vrot.slane %v2381, %v2396
      %s2399 = sor.u32 256, 80
      %2400 = vbcast.lane.b32.xlu0 %v2397, %s2399
      %v2401 = vpop.permute.xlu0 %2400
      %s2403 = sor.u32 256, 88
      %2404 = vbcast.lane.b32.xlu0 %v2397, %s2403
      %v2405 = vpop.permute.xlu0 %2404
      %v2406 = vlaneseq
      %v2407 = vshrl.u32 %v2406, 7
      %v2408 = vsub.s32 2, %v2407
      %v2409 = vrot.slane %v2381, %v2408
      %s2411 = sor.u32 256, 80
      %2412 = vbcast.lane.b32.xlu0 %v2409, %s2411
      %v2413 = vpop.permute.xlu0 %2412
      %s2415 = sor.u32 256, 88
      %2416 = vbcast.lane.b32.xlu0 %v2409, %s2415
      %v2417 = vpop.permute.xlu0 %2416
      %v2418 = vlaneseq
      %v2419 = vshrl.u32 %v2418, 7
      %v2420 = vsub.s32 3, %v2419
      %v2421 = vrot.slane %v2381, %v2420
      %s2423 = sor.u32 256, 80
      %2424 = vbcast.lane.b32.xlu0 %v2421, %s2423
      %v2425 = vpop.permute.xlu0 %2424
      %s2427 = sor.u32 256, 88
      %2428 = vbcast.lane.b32.xlu0 %v2421, %s2427
      %v2429 = vpop.permute.xlu0 %2428
      %v2430 = vlaneseq
      %v2431 = vshrl.u32 %v2430, 7
      %v2432 = vsub.s32 4, %v2431
      %v2433 = vrot.slane %v2381, %v2432
      %s2435 = sor.u32 256, 80
      %2436 = vbcast.lane.b32.xlu0 %v2433, %s2435
      %v2437 = vpop.permute.xlu0 %2436
      %s2439 = sor.u32 256, 88
      %2440 = vbcast.lane.b32.xlu0 %v2433, %s2439
      %v2441 = vpop.permute.xlu0 %2440
      %v2442 = vlaneseq
      %v2443 = vshrl.u32 %v2442, 7
      %v2444 = vsub.s32 5, %v2443
      %v2445 = vrot.slane %v2381, %v2444
      %s2447 = sor.u32 256, 80
      %2448 = vbcast.lane.b32.xlu0 %v2445, %s2447
      %v2449 = vpop.permute.xlu0 %2448
      %s2451 = sor.u32 256, 88
      %2452 = vbcast.lane.b32.xlu0 %v2445, %s2451
      %v2453 = vpop.permute.xlu0 %2452
      %v2454 = vlaneseq
      %v2455 = vshrl.u32 %v2454, 7
      %v2456 = vsub.s32 6, %v2455
      %v2457 = vrot.slane %v2381, %v2456
      %s2459 = sor.u32 256, 80
      %2460 = vbcast.lane.b32.xlu0 %v2457, %s2459
      %v2461 = vpop.permute.xlu0 %2460
      %s2463 = sor.u32 256, 88
      %2464 = vbcast.lane.b32.xlu0 %v2457, %s2463
      %v2465 = vpop.permute.xlu0 %2464
      %v2466 = vlaneseq
      %v2467 = vshrl.u32 %v2466, 7
      %v2468 = vsub.s32 7, %v2467
      %v2469 = vrot.slane %v2381, %v2468
      %s2471 = sor.u32 256, 80
      %2472 = vbcast.lane.b32.xlu0 %v2469, %s2471
      %v2473 = vpop.permute.xlu0 %2472
      %s2475 = sor.u32 256, 88
      %2476 = vbcast.lane.b32.xlu0 %v2469, %s2475
      %v2477 = vpop.permute.xlu0 %2476
      %v2478 = vcombine.low %v2389, %v2413
      %v2479 = vcombine.high %v2389, %v2413
      %v2481 = vunpack.c.l.s4 1983009808
      %v2482 = vunpack.c.0.s8 %v2481
      %v2483 = vlaneseq
      %v2484 = vshrl.u32 %v2483, 7
      %v2485 = vsub.s32 %v2482, %v2484
      %v2486 = vrot.slane %v2478, %v2485
      %v2488 = vunpack.c.l.s4 1983009808
      %v2489 = vunpack.c.0.s8 %v2488
      %v2490 = vlaneseq
      %v2491 = vshrl.u32 %v2490, 7
      %v2492 = vsub.s32 %v2489, %v2491
      %v2493 = vrot.slane %v2479, %v2492
      %v2494 = vcombine.low %v2401, %v2425
      %v2495 = vcombine.high %v2401, %v2425
      %v2497 = vunpack.c.l.s4 1983009808
      %v2498 = vunpack.c.0.s8 %v2497
      %v2499 = vlaneseq
      %v2500 = vshrl.u32 %v2499, 7
      %v2501 = vsub.s32 %v2498, %v2500
      %v2502 = vrot.slane %v2494, %v2501
      %v2504 = vunpack.c.l.s4 1983009808
      %v2505 = vunpack.c.0.s8 %v2504
      %v2506 = vlaneseq
      %v2507 = vshrl.u32 %v2506, 7
      %v2508 = vsub.s32 %v2505, %v2507
      %v2509 = vrot.slane %v2495, %v2508
      %v2510 = vcombine.low %v2437, %v2461
      %v2511 = vcombine.high %v2437, %v2461
      %v2513 = vunpack.c.l.s4 1983009808
      %v2514 = vunpack.c.0.s8 %v2513
      %v2515 = vlaneseq
      %v2516 = vshrl.u32 %v2515, 7
      %v2517 = vsub.s32 %v2514, %v2516
      %v2518 = vrot.slane %v2510, %v2517
      %v2520 = vunpack.c.l.s4 1983009808
      %v2521 = vunpack.c.0.s8 %v2520
      %v2522 = vlaneseq
      %v2523 = vshrl.u32 %v2522, 7
      %v2524 = vsub.s32 %v2521, %v2523
      %v2525 = vrot.slane %v2511, %v2524
      %v2526 = vcombine.low %v2449, %v2473
      %v2527 = vcombine.high %v2449, %v2473
      %v2529 = vunpack.c.l.s4 1983009808
      %v2530 = vunpack.c.0.s8 %v2529
      %v2531 = vlaneseq
      %v2532 = vshrl.u32 %v2531, 7
      %v2533 = vsub.s32 %v2530, %v2532
      %v2534 = vrot.slane %v2526, %v2533
      %v2536 = vunpack.c.l.s4 1983009808
      %v2537 = vunpack.c.0.s8 %v2536
      %v2538 = vlaneseq
      %v2539 = vshrl.u32 %v2538, 7
      %v2540 = vsub.s32 %v2537, %v2539
      %v2541 = vrot.slane %v2527, %v2540
      %v2542 = vcombine.low %v2486, %v2502
      %v2543 = vcombine.high %v2486, %v2502
      %v2545 = vunpack.c.l.s4 1934713408
      %v2546 = vunpack.c.0.s8 %v2545
      %v2547 = vlaneseq
      %v2548 = vshrl.u32 %v2547, 7
      %v2549 = vsub.s32 %v2546, %v2548
      %v2550 = vrot.slane %v2542, %v2549
      %v2552 = vunpack.c.l.s4 1934713408
      %v2553 = vunpack.c.0.s8 %v2552
      %v2554 = vlaneseq
      %v2555 = vshrl.u32 %v2554, 7
      %v2556 = vsub.s32 %v2553, %v2555
      %v2557 = vrot.slane %v2543, %v2556
      %v2558 = vcombine.low %v2493, %v2509
      %v2559 = vcombine.high %v2493, %v2509
      %v2561 = vunpack.c.l.s4 1934713408
      %v2562 = vunpack.c.0.s8 %v2561
      %v2563 = vlaneseq
      %v2564 = vshrl.u32 %v2563, 7
      %v2565 = vsub.s32 %v2562, %v2564
      %v2566 = vrot.slane %v2558, %v2565
      %v2568 = vunpack.c.l.s4 1934713408
      %v2569 = vunpack.c.0.s8 %v2568
      %v2570 = vlaneseq
      %v2571 = vshrl.u32 %v2570, 7
      %v2572 = vsub.s32 %v2569, %v2571
      %v2573 = vrot.slane %v2559, %v2572
      %v2574 = vcombine.low %v2518, %v2534
      %v2575 = vcombine.high %v2518, %v2534
      %v2577 = vunpack.c.l.s4 1934713408
      %v2578 = vunpack.c.0.s8 %v2577
      %v2579 = vlaneseq
      %v2580 = vshrl.u32 %v2579, 7
      %v2581 = vsub.s32 %v2578, %v2580
      %v2582 = vrot.slane %v2574, %v2581
      %v2584 = vunpack.c.l.s4 1934713408
      %v2585 = vunpack.c.0.s8 %v2584
      %v2586 = vlaneseq
      %v2587 = vshrl.u32 %v2586, 7
      %v2588 = vsub.s32 %v2585, %v2587
      %v2589 = vrot.slane %v2575, %v2588
      %v2590 = vcombine.low %v2525, %v2541
      %v2591 = vcombine.high %v2525, %v2541
      %v2593 = vunpack.c.l.s4 1934713408
      %v2594 = vunpack.c.0.s8 %v2593
      %v2595 = vlaneseq
      %v2596 = vshrl.u32 %v2595, 7
      %v2597 = vsub.s32 %v2594, %v2596
      %v2598 = vrot.slane %v2590, %v2597
      %v2600 = vunpack.c.l.s4 1934713408
      %v2601 = vunpack.c.0.s8 %v2600
      %v2602 = vlaneseq
      %v2603 = vshrl.u32 %v2602, 7
      %v2604 = vsub.s32 %v2601, %v2603
      %v2605 = vrot.slane %v2591, %v2604
      %v2606 = vcombine.low %v2550, %v2582
      %v2607 = vcombine.high %v2550, %v2582
      %v2608 = vcombine.low %v2557, %v2589
      %v2609 = vcombine.high %v2557, %v2589
      %v2610 = vcombine.low %v2566, %v2598
      %v2611 = vcombine.high %v2566, %v2598
      %v2612 = vcombine.low %v2573, %v2605
      %v2613 = vcombine.high %v2573, %v2605
      %v2614 = vcombine.low %v2393, %v2417
      %v2615 = vcombine.high %v2393, %v2417
      %v2617 = vunpack.c.l.s4 1983009808
      %v2618 = vunpack.c.0.s8 %v2617
      %v2619 = vlaneseq
      %v2620 = vshrl.u32 %v2619, 7
      %v2621 = vsub.s32 %v2618, %v2620
      %v2622 = vrot.slane %v2614, %v2621
      %v2624 = vunpack.c.l.s4 1983009808
      %v2625 = vunpack.c.0.s8 %v2624
      %v2626 = vlaneseq
      %v2627 = vshrl.u32 %v2626, 7
      %v2628 = vsub.s32 %v2625, %v2627
      %v2629 = vrot.slane %v2615, %v2628
      %v2630 = vcombine.low %v2405, %v2429
      %v2631 = vcombine.high %v2405, %v2429
      %v2633 = vunpack.c.l.s4 1983009808
      %v2634 = vunpack.c.0.s8 %v2633
      %v2635 = vlaneseq
      %v2636 = vshrl.u32 %v2635, 7
      %v2637 = vsub.s32 %v2634, %v2636
      %v2638 = vrot.slane %v2630, %v2637
      %v2640 = vunpack.c.l.s4 1983009808
      %v2641 = vunpack.c.0.s8 %v2640
      %v2642 = vlaneseq
      %v2643 = vshrl.u32 %v2642, 7
      %v2644 = vsub.s32 %v2641, %v2643
      %v2645 = vrot.slane %v2631, %v2644
      %v2646 = vcombine.low %v2441, %v2465
      %v2647 = vcombine.high %v2441, %v2465
      %v2649 = vunpack.c.l.s4 1983009808
      %v2650 = vunpack.c.0.s8 %v2649
      %v2651 = vlaneseq
      %v2652 = vshrl.u32 %v2651, 7
      %v2653 = vsub.s32 %v2650, %v2652
      %v2654 = vrot.slane %v2646, %v2653
      %v2656 = vunpack.c.l.s4 1983009808
      %v2657 = vunpack.c.0.s8 %v2656
      %v2658 = vlaneseq
      %v2659 = vshrl.u32 %v2658, 7
      %v2660 = vsub.s32 %v2657, %v2659
      %v2661 = vrot.slane %v2647, %v2660
      %v2662 = vcombine.low %v2453, %v2477
      %v2663 = vcombine.high %v2453, %v2477
      %v2665 = vunpack.c.l.s4 1983009808
      %v2666 = vunpack.c.0.s8 %v2665
      %v2667 = vlaneseq
      %v2668 = vshrl.u32 %v2667, 7
      %v2669 = vsub.s32 %v2666, %v2668
      %v2670 = vrot.slane %v2662, %v2669
      %v2672 = vunpack.c.l.s4 1983009808
      %v2673 = vunpack.c.0.s8 %v2672
      %v2674 = vlaneseq
      %v2675 = vshrl.u32 %v2674, 7
      %v2676 = vsub.s32 %v2673, %v2675
      %v2677 = vrot.slane %v2663, %v2676
      %v2678 = vcombine.low %v2622, %v2638
      %v2679 = vcombine.high %v2622, %v2638
      %v2681 = vunpack.c.l.s4 1934713408
      %v2682 = vunpack.c.0.s8 %v2681
      %v2683 = vlaneseq
      %v2684 = vshrl.u32 %v2683, 7
      %v2685 = vsub.s32 %v2682, %v2684
      %v2686 = vrot.slane %v2678, %v2685
      %v2688 = vunpack.c.l.s4 1934713408
      %v2689 = vunpack.c.0.s8 %v2688
      %v2690 = vlaneseq
      %v2691 = vshrl.u32 %v2690, 7
      %v2692 = vsub.s32 %v2689, %v2691
      %v2693 = vrot.slane %v2679, %v2692
      %v2694 = vcombine.low %v2629, %v2645
      %v2695 = vcombine.high %v2629, %v2645
      %v2697 = vunpack.c.l.s4 1934713408
      %v2698 = vunpack.c.0.s8 %v2697
      %v2699 = vlaneseq
      %v2700 = vshrl.u32 %v2699, 7
      %v2701 = vsub.s32 %v2698, %v2700
      %v2702 = vrot.slane %v2694, %v2701
      %v2704 = vunpack.c.l.s4 1934713408
      %v2705 = vunpack.c.0.s8 %v2704
      %v2706 = vlaneseq
      %v2707 = vshrl.u32 %v2706, 7
      %v2708 = vsub.s32 %v2705, %v2707
      %v2709 = vrot.slane %v2695, %v2708
      %v2710 = vcombine.low %v2654, %v2670
      %v2711 = vcombine.high %v2654, %v2670
      %v2713 = vunpack.c.l.s4 1934713408
      %v2714 = vunpack.c.0.s8 %v2713
      %v2715 = vlaneseq
      %v2716 = vshrl.u32 %v2715, 7
      %v2717 = vsub.s32 %v2714, %v2716
      %v2718 = vrot.slane %v2710, %v2717
      %v2720 = vunpack.c.l.s4 1934713408
      %v2721 = vunpack.c.0.s8 %v2720
      %v2722 = vlaneseq
      %v2723 = vshrl.u32 %v2722, 7
      %v2724 = vsub.s32 %v2721, %v2723
      %v2725 = vrot.slane %v2711, %v2724
      %v2726 = vcombine.low %v2661, %v2677
      %v2727 = vcombine.high %v2661, %v2677
      %v2729 = vunpack.c.l.s4 1934713408
      %v2730 = vunpack.c.0.s8 %v2729
      %v2731 = vlaneseq
      %v2732 = vshrl.u32 %v2731, 7
      %v2733 = vsub.s32 %v2730, %v2732
      %v2734 = vrot.slane %v2726, %v2733
      %v2736 = vunpack.c.l.s4 1934713408
      %v2737 = vunpack.c.0.s8 %v2736
      %v2738 = vlaneseq
      %v2739 = vshrl.u32 %v2738, 7
      %v2740 = vsub.s32 %v2737, %v2739
      %v2741 = vrot.slane %v2727, %v2740
      %v2742 = vcombine.low %v2686, %v2718
      %v2743 = vcombine.high %v2686, %v2718
      %v2744 = vcombine.low %v2693, %v2725
      %v2745 = vcombine.high %v2693, %v2725
      %v2746 = vcombine.low %v2702, %v2734
      %v2747 = vcombine.high %v2702, %v2734
      %v2748 = vcombine.low %v2709, %v2741
      %v2749 = vcombine.high %v2709, %v2741
      %2751 = vrot.lane.b32.xlu0 %v2607, 2
      %v2752 = vpop.permute.xlu0 %2751
      %2755 = vrot.lane.b32.xlu0 %v2608, 4
      %v2756 = vpop.permute.xlu0 %2755
      %2759 = vrot.lane.b32.xlu0 %v2609, 6
      %v2760 = vpop.permute.xlu0 %2759
      %2763 = vrot.lane.b32.xlu0 %v2610, 8
      %v2764 = vpop.permute.xlu0 %2763
      %2767 = vrot.lane.b32.xlu0 %v2611, 10
      %v2768 = vpop.permute.xlu0 %2767
      %2771 = vrot.lane.b32.xlu0 %v2612, 12
      %v2772 = vpop.permute.xlu0 %2771
      %2775 = vrot.lane.b32.xlu0 %v2613, 14
      %v2776 = vpop.permute.xlu0 %2775
      %2779 = vrot.lane.b32.xlu0 %v2742, 16
      %v2780 = vpop.permute.xlu0 %2779
      %2783 = vrot.lane.b32.xlu0 %v2743, 18
      %v2784 = vpop.permute.xlu0 %2783
      %2787 = vrot.lane.b32.xlu0 %v2744, 20
      %v2788 = vpop.permute.xlu0 %2787
      %2791 = vrot.lane.b32.xlu0 %v2745, 22
      %v2792 = vpop.permute.xlu0 %2791
      %2795 = vrot.lane.b32.xlu0 %v2746, 24
      %v2796 = vpop.permute.xlu0 %2795
      %2799 = vrot.lane.b32.xlu0 %v2747, 26
      %v2800 = vpop.permute.xlu0 %2799
      %2803 = vrot.lane.b32.xlu0 %v2748, 28
      %v2804 = vpop.permute.xlu0 %2803
      %2807 = vrot.lane.b32.xlu0 %v2749, 30
      %v2808 = vpop.permute.xlu0 %2807
      %v2810 = vsel %vm535, %v2606, %v2752
      %v2811 = vsel %vm537, %v2810, %v2756
      %v2812 = vsel %vm539, %v2811, %v2760
      %v2813 = vsel %vm541, %v2812, %v2764
      %v2814 = vsel %vm543, %v2813, %v2768
      %v2815 = vsel %vm545, %v2814, %v2772
      %v2816 = vsel %vm547, %v2815, %v2776
      %v2817 = vsel %vm549, %v2816, %v2780
      %v2818 = vsel %vm551, %v2817, %v2784
      %v2819 = vsel %vm553, %v2818, %v2788
      %v2820 = vsel %vm555, %v2819, %v2792
      %v2821 = vsel %vm557, %v2820, %v2796
      %v2822 = vsel %vm559, %v2821, %v2800
      %v2823 = vsel %vm561, %v2822, %v2804
      %v2824 = vsel %vm563, %v2823, %v2808
      %2826 = vrot.lane.b32.xlu0 %v2824, 64
      %v2827 = vpop.permute.xlu0 %2826
      %2829 = vst.msk [vmem:[%s113 + $0x10] sm:$0xff] %vm1021, %v2827
      %2830 = vrot.lane.b32.xlu0 %v2824, 96
      %v2831 = vpop.permute.xlu0 %2830
      %2833 = vst.msk [vmem:[%s113 + $0x10] sm:$0xff] %vm1026, %v2831
      %v2834 = vld [vmem:[%s108] sm:$0xff]
      %v2835 = vlaneseq
      %v2836 = vshrl.u32 %v2835, 7
      %v2837 = vsub.s32 0, %v2836
      %v2838 = vrot.slane %v2834, %v2837
      %s2840 = sor.u32 256, 96
      %2841 = vbcast.lane.b32.xlu0 %v2838, %s2840
      %v2842 = vpop.permute.xlu0 %2841
      %s2844 = sor.u32 256, 104
      %2845 = vbcast.lane.b32.xlu0 %v2838, %s2844
      %v2846 = vpop.permute.xlu0 %2845
      %v2847 = vlaneseq
      %v2848 = vshrl.u32 %v2847, 7
      %v2849 = vsub.s32 1, %v2848
      %v2850 = vrot.slane %v2834, %v2849
      %s2852 = sor.u32 256, 96
      %2853 = vbcast.lane.b32.xlu0 %v2850, %s2852
      %v2854 = vpop.permute.xlu0 %2853
      %s2856 = sor.u32 256, 104
      %2857 = vbcast.lane.b32.xlu0 %v2850, %s2856
      %v2858 = vpop.permute.xlu0 %2857
      %v2859 = vlaneseq
      %v2860 = vshrl.u32 %v2859, 7
      %v2861 = vsub.s32 2, %v2860
      %v2862 = vrot.slane %v2834, %v2861
      %s2864 = sor.u32 256, 96
      %2865 = vbcast.lane.b32.xlu0 %v2862, %s2864
      %v2866 = vpop.permute.xlu0 %2865
      %s2868 = sor.u32 256, 104
      %2869 = vbcast.lane.b32.xlu0 %v2862, %s2868
      %v2870 = vpop.permute.xlu0 %2869
      %v2871 = vlaneseq
      %v2872 = vshrl.u32 %v2871, 7
      %v2873 = vsub.s32 3, %v2872
      %v2874 = vrot.slane %v2834, %v2873
      %s2876 = sor.u32 256, 96
      %2877 = vbcast.lane.b32.xlu0 %v2874, %s2876
      %v2878 = vpop.permute.xlu0 %2877
      %s2880 = sor.u32 256, 104
      %2881 = vbcast.lane.b32.xlu0 %v2874, %s2880
      %v2882 = vpop.permute.xlu0 %2881
      %v2883 = vlaneseq
      %v2884 = vshrl.u32 %v2883, 7
      %v2885 = vsub.s32 4, %v2884
      %v2886 = vrot.slane %v2834, %v2885
      %s2888 = sor.u32 256, 96
      %2889 = vbcast.lane.b32.xlu0 %v2886, %s2888
      %v2890 = vpop.permute.xlu0 %2889
      %s2892 = sor.u32 256, 104
      %2893 = vbcast.lane.b32.xlu0 %v2886, %s2892
      %v2894 = vpop.permute.xlu0 %2893
      %v2895 = vlaneseq
      %v2896 = vshrl.u32 %v2895, 7
      %v2897 = vsub.s32 5, %v2896
      %v2898 = vrot.slane %v2834, %v2897
      %s2900 = sor.u32 256, 96
      %2901 = vbcast.lane.b32.xlu0 %v2898, %s2900
      %v2902 = vpop.permute.xlu0 %2901
      %s2904 = sor.u32 256, 104
      %2905 = vbcast.lane.b32.xlu0 %v2898, %s2904
      %v2906 = vpop.permute.xlu0 %2905
      %v2907 = vlaneseq
      %v2908 = vshrl.u32 %v2907, 7
      %v2909 = vsub.s32 6, %v2908
      %v2910 = vrot.slane %v2834, %v2909
      %s2912 = sor.u32 256, 96
      %2913 = vbcast.lane.b32.xlu0 %v2910, %s2912
      %v2914 = vpop.permute.xlu0 %2913
      %s2916 = sor.u32 256, 104
      %2917 = vbcast.lane.b32.xlu0 %v2910, %s2916
      %v2918 = vpop.permute.xlu0 %2917
      %v2919 = vlaneseq
      %v2920 = vshrl.u32 %v2919, 7
      %v2921 = vsub.s32 7, %v2920
      %v2922 = vrot.slane %v2834, %v2921
      %s2924 = sor.u32 256, 96
      %2925 = vbcast.lane.b32.xlu0 %v2922, %s2924
      %v2926 = vpop.permute.xlu0 %2925
      %s2928 = sor.u32 256, 104
      %2929 = vbcast.lane.b32.xlu0 %v2922, %s2928
      %v2930 = vpop.permute.xlu0 %2929
      %v2931 = vcombine.low %v2842, %v2866
      %v2932 = vcombine.high %v2842, %v2866
      %v2934 = vunpack.c.l.s4 1983009808
      %v2935 = vunpack.c.0.s8 %v2934
      %v2936 = vlaneseq
      %v2937 = vshrl.u32 %v2936, 7
      %v2938 = vsub.s32 %v2935, %v2937
      %v2939 = vrot.slane %v2931, %v2938
      %v2941 = vunpack.c.l.s4 1983009808
      %v2942 = vunpack.c.0.s8 %v2941
      %v2943 = vlaneseq
      %v2944 = vshrl.u32 %v2943, 7
      %v2945 = vsub.s32 %v2942, %v2944
      %v2946 = vrot.slane %v2932, %v2945
      %v2947 = vcombine.low %v2854, %v2878
      %v2948 = vcombine.high %v2854, %v2878
      %v2950 = vunpack.c.l.s4 1983009808
      %v2951 = vunpack.c.0.s8 %v2950
      %v2952 = vlaneseq
      %v2953 = vshrl.u32 %v2952, 7
      %v2954 = vsub.s32 %v2951, %v2953
      %v2955 = vrot.slane %v2947, %v2954
      %v2957 = vunpack.c.l.s4 1983009808
      %v2958 = vunpack.c.0.s8 %v2957
      %v2959 = vlaneseq
      %v2960 = vshrl.u32 %v2959, 7
      %v2961 = vsub.s32 %v2958, %v2960
      %v2962 = vrot.slane %v2948, %v2961
      %v2963 = vcombine.low %v2890, %v2914
      %v2964 = vcombine.high %v2890, %v2914
      %v2966 = vunpack.c.l.s4 1983009808
      %v2967 = vunpack.c.0.s8 %v2966
      %v2968 = vlaneseq
      %v2969 = vshrl.u32 %v2968, 7
      %v2970 = vsub.s32 %v2967, %v2969
      %v2971 = vrot.slane %v2963, %v2970
      %v2973 = vunpack.c.l.s4 1983009808
      %v2974 = vunpack.c.0.s8 %v2973
      %v2975 = vlaneseq
      %v2976 = vshrl.u32 %v2975, 7
      %v2977 = vsub.s32 %v2974, %v2976
      %v2978 = vrot.slane %v2964, %v2977
      %v2979 = vcombine.low %v2902, %v2926
      %v2980 = vcombine.high %v2902, %v2926
      %v2982 = vunpack.c.l.s4 1983009808
      %v2983 = vunpack.c.0.s8 %v2982
      %v2984 = vlaneseq
      %v2985 = vshrl.u32 %v2984, 7
      %v2986 = vsub.s32 %v2983, %v2985
      %v2987 = vrot.slane %v2979, %v2986
      %v2989 = vunpack.c.l.s4 1983009808
      %v2990 = vunpack.c.0.s8 %v2989
      %v2991 = vlaneseq
      %v2992 = vshrl.u32 %v2991, 7
      %v2993 = vsub.s32 %v2990, %v2992
      %v2994 = vrot.slane %v2980, %v2993
      %v2995 = vcombine.low %v2939, %v2955
      %v2996 = vcombine.high %v2939, %v2955
      %v2998 = vunpack.c.l.s4 1934713408
      %v2999 = vunpack.c.0.s8 %v2998
      %v3000 = vlaneseq
      %v3001 = vshrl.u32 %v3000, 7
      %v3002 = vsub.s32 %v2999, %v3001
      %v3003 = vrot.slane %v2995, %v3002
      %v3005 = vunpack.c.l.s4 1934713408
      %v3006 = vunpack.c.0.s8 %v3005
      %v3007 = vlaneseq
      %v3008 = vshrl.u32 %v3007, 7
      %v3009 = vsub.s32 %v3006, %v3008
      %v3010 = vrot.slane %v2996, %v3009
      %v3011 = vcombine.low %v2946, %v2962
      %v3012 = vcombine.high %v2946, %v2962
      %v3014 = vunpack.c.l.s4 1934713408
      %v3015 = vunpack.c.0.s8 %v3014
      %v3016 = vlaneseq
      %v3017 = vshrl.u32 %v3016, 7
      %v3018 = vsub.s32 %v3015, %v3017
      %v3019 = vrot.slane %v3011, %v3018
      %v3021 = vunpack.c.l.s4 1934713408
      %v3022 = vunpack.c.0.s8 %v3021
      %v3023 = vlaneseq
      %v3024 = vshrl.u32 %v3023, 7
      %v3025 = vsub.s32 %v3022, %v3024
      %v3026 = vrot.slane %v3012, %v3025
      %v3027 = vcombine.low %v2971, %v2987
      %v3028 = vcombine.high %v2971, %v2987
      %v3030 = vunpack.c.l.s4 1934713408
      %v3031 = vunpack.c.0.s8 %v3030
      %v3032 = vlaneseq
      %v3033 = vshrl.u32 %v3032, 7
      %v3034 = vsub.s32 %v3031, %v3033
      %v3035 = vrot.slane %v3027, %v3034
      %v3037 = vunpack.c.l.s4 1934713408
      %v3038 = vunpack.c.0.s8 %v3037
      %v3039 = vlaneseq
      %v3040 = vshrl.u32 %v3039, 7
      %v3041 = vsub.s32 %v3038, %v3040
      %v3042 = vrot.slane %v3028, %v3041
      %v3043 = vcombine.low %v2978, %v2994
      %v3044 = vcombine.high %v2978, %v2994
      %v3046 = vunpack.c.l.s4 1934713408
      %v3047 = vunpack.c.0.s8 %v3046
      %v3048 = vlaneseq
      %v3049 = vshrl.u32 %v3048, 7
      %v3050 = vsub.s32 %v3047, %v3049
      %v3051 = vrot.slane %v3043, %v3050
      %v3053 = vunpack.c.l.s4 1934713408
      %v3054 = vunpack.c.0.s8 %v3053
      %v3055 = vlaneseq
      %v3056 = vshrl.u32 %v3055, 7
      %v3057 = vsub.s32 %v3054, %v3056
      %v3058 = vrot.slane %v3044, %v3057
      %v3059 = vcombine.low %v3003, %v3035
      %v3060 = vcombine.high %v3003, %v3035
      %v3061 = vcombine.low %v3010, %v3042
      %v3062 = vcombine.high %v3010, %v3042
      %v3063 = vcombine.low %v3019, %v3051
      %v3064 = vcombine.high %v3019, %v3051
      %v3065 = vcombine.low %v3026, %v3058
      %v3066 = vcombine.high %v3026, %v3058
      %v3067 = vcombine.low %v2846, %v2870
      %v3068 = vcombine.high %v2846, %v2870
      %v3070 = vunpack.c.l.s4 1983009808
      %v3071 = vunpack.c.0.s8 %v3070
      %v3072 = vlaneseq
      %v3073 = vshrl.u32 %v3072, 7
      %v3074 = vsub.s32 %v3071, %v3073
      %v3075 = vrot.slane %v3067, %v3074
      %v3077 = vunpack.c.l.s4 1983009808
      %v3078 = vunpack.c.0.s8 %v3077
      %v3079 = vlaneseq
      %v3080 = vshrl.u32 %v3079, 7
      %v3081 = vsub.s32 %v3078, %v3080
      %v3082 = vrot.slane %v3068, %v3081
      %v3083 = vcombine.low %v2858, %v2882
      %v3084 = vcombine.high %v2858, %v2882
      %v3086 = vunpack.c.l.s4 1983009808
      %v3087 = vunpack.c.0.s8 %v3086
      %v3088 = vlaneseq
      %v3089 = vshrl.u32 %v3088, 7
      %v3090 = vsub.s32 %v3087, %v3089
      %v3091 = vrot.slane %v3083, %v3090
      %v3093 = vunpack.c.l.s4 1983009808
      %v3094 = vunpack.c.0.s8 %v3093
      %v3095 = vlaneseq
      %v3096 = vshrl.u32 %v3095, 7
      %v3097 = vsub.s32 %v3094, %v3096
      %v3098 = vrot.slane %v3084, %v3097
      %v3099 = vcombine.low %v2894, %v2918
      %v3100 = vcombine.high %v2894, %v2918
      %v3102 = vunpack.c.l.s4 1983009808
      %v3103 = vunpack.c.0.s8 %v3102
      %v3104 = vlaneseq
      %v3105 = vshrl.u32 %v3104, 7
      %v3106 = vsub.s32 %v3103, %v3105
      %v3107 = vrot.slane %v3099, %v3106
      %v3109 = vunpack.c.l.s4 1983009808
      %v3110 = vunpack.c.0.s8 %v3109
      %v3111 = vlaneseq
      %v3112 = vshrl.u32 %v3111, 7
      %v3113 = vsub.s32 %v3110, %v3112
      %v3114 = vrot.slane %v3100, %v3113
      %v3115 = vcombine.low %v2906, %v2930
      %v3116 = vcombine.high %v2906, %v2930
      %v3118 = vunpack.c.l.s4 1983009808
      %v3119 = vunpack.c.0.s8 %v3118
      %v3120 = vlaneseq
      %v3121 = vshrl.u32 %v3120, 7
      %v3122 = vsub.s32 %v3119, %v3121
      %v3123 = vrot.slane %v3115, %v3122
      %v3125 = vunpack.c.l.s4 1983009808
      %v3126 = vunpack.c.0.s8 %v3125
      %v3127 = vlaneseq
      %v3128 = vshrl.u32 %v3127, 7
      %v3129 = vsub.s32 %v3126, %v3128
      %v3130 = vrot.slane %v3116, %v3129
      %v3131 = vcombine.low %v3075, %v3091
      %v3132 = vcombine.high %v3075, %v3091
      %v3134 = vunpack.c.l.s4 1934713408
      %v3135 = vunpack.c.0.s8 %v3134
      %v3136 = vlaneseq
      %v3137 = vshrl.u32 %v3136, 7
      %v3138 = vsub.s32 %v3135, %v3137
      %v3139 = vrot.slane %v3131, %v3138
      %v3141 = vunpack.c.l.s4 1934713408
      %v3142 = vunpack.c.0.s8 %v3141
      %v3143 = vlaneseq
      %v3144 = vshrl.u32 %v3143, 7
      %v3145 = vsub.s32 %v3142, %v3144
      %v3146 = vrot.slane %v3132, %v3145
      %v3147 = vcombine.low %v3082, %v3098
      %v3148 = vcombine.high %v3082, %v3098
      %v3150 = vunpack.c.l.s4 1934713408
      %v3151 = vunpack.c.0.s8 %v3150
      %v3152 = vlaneseq
      %v3153 = vshrl.u32 %v3152, 7
      %v3154 = vsub.s32 %v3151, %v3153
      %v3155 = vrot.slane %v3147, %v3154
      %v3157 = vunpack.c.l.s4 1934713408
      %v3158 = vunpack.c.0.s8 %v3157
      %v3159 = vlaneseq
      %v3160 = vshrl.u32 %v3159, 7
      %v3161 = vsub.s32 %v3158, %v3160
      %v3162 = vrot.slane %v3148, %v3161
      %v3163 = vcombine.low %v3107, %v3123
      %v3164 = vcombine.high %v3107, %v3123
      %v3166 = vunpack.c.l.s4 1934713408
      %v3167 = vunpack.c.0.s8 %v3166
      %v3168 = vlaneseq
      %v3169 = vshrl.u32 %v3168, 7
      %v3170 = vsub.s32 %v3167, %v3169
      %v3171 = vrot.slane %v3163, %v3170
      %v3173 = vunpack.c.l.s4 1934713408
      %v3174 = vunpack.c.0.s8 %v3173
      %v3175 = vlaneseq
      %v3176 = vshrl.u32 %v3175, 7
      %v3177 = vsub.s32 %v3174, %v3176
      %v3178 = vrot.slane %v3164, %v3177
      %v3179 = vcombine.low %v3114, %v3130
      %v3180 = vcombine.high %v3114, %v3130
      %v3182 = vunpack.c.l.s4 1934713408
      %v3183 = vunpack.c.0.s8 %v3182
      %v3184 = vlaneseq
      %v3185 = vshrl.u32 %v3184, 7
      %v3186 = vsub.s32 %v3183, %v3185
      %v3187 = vrot.slane %v3179, %v3186
      %v3189 = vunpack.c.l.s4 1934713408
      %v3190 = vunpack.c.0.s8 %v3189
      %v3191 = vlaneseq
      %v3192 = vshrl.u32 %v3191, 7
      %v3193 = vsub.s32 %v3190, %v3192
      %v3194 = vrot.slane %v3180, %v3193
      %v3195 = vcombine.low %v3139, %v3171
      %v3196 = vcombine.high %v3139, %v3171
      %v3197 = vcombine.low %v3146, %v3178
      %v3198 = vcombine.high %v3146, %v3178
      %v3199 = vcombine.low %v3155, %v3187
      %v3200 = vcombine.high %v3155, %v3187
      %v3201 = vcombine.low %v3162, %v3194
      %v3202 = vcombine.high %v3162, %v3194
      %3204 = vrot.lane.b32.xlu0 %v3060, 2
      %v3205 = vpop.permute.xlu0 %3204
      %3208 = vrot.lane.b32.xlu0 %v3061, 4
      %v3209 = vpop.permute.xlu0 %3208
      %3212 = vrot.lane.b32.xlu0 %v3062, 6
      %v3213 = vpop.permute.xlu0 %3212
      %3216 = vrot.lane.b32.xlu0 %v3063, 8
      %v3217 = vpop.permute.xlu0 %3216
      %3220 = vrot.lane.b32.xlu0 %v3064, 10
      %v3221 = vpop.permute.xlu0 %3220
      %3224 = vrot.lane.b32.xlu0 %v3065, 12
      %v3225 = vpop.permute.xlu0 %3224
      %3228 = vrot.lane.b32.xlu0 %v3066, 14
      %v3229 = vpop.permute.xlu0 %3228
      %3232 = vrot.lane.b32.xlu0 %v3195, 16
      %v3233 = vpop.permute.xlu0 %3232
      %3236 = vrot.lane.b32.xlu0 %v3196, 18
      %v3237 = vpop.permute.xlu0 %3236
      %3240 = vrot.lane.b32.xlu0 %v3197, 20
      %v3241 = vpop.permute.xlu0 %3240
      %3244 = vrot.lane.b32.xlu0 %v3198, 22
      %v3245 = vpop.permute.xlu0 %3244
      %3248 = vrot.lane.b32.xlu0 %v3199, 24
      %v3249 = vpop.permute.xlu0 %3248
      %3252 = vrot.lane.b32.xlu0 %v3200, 26
      %v3253 = vpop.permute.xlu0 %3252
      %3256 = vrot.lane.b32.xlu0 %v3201, 28
      %v3257 = vpop.permute.xlu0 %3256
      %3260 = vrot.lane.b32.xlu0 %v3202, 30
      %v3261 = vpop.permute.xlu0 %3260
      %v3263 = vsel %vm535, %v3059, %v3205
      %v3264 = vsel %vm537, %v3263, %v3209
      %v3265 = vsel %vm539, %v3264, %v3213
      %v3266 = vsel %vm541, %v3265, %v3217
      %v3267 = vsel %vm543, %v3266, %v3221
      %v3268 = vsel %vm545, %v3267, %v3225
      %v3269 = vsel %vm547, %v3268, %v3229
      %v3270 = vsel %vm549, %v3269, %v3233
      %v3271 = vsel %vm551, %v3270, %v3237
      %v3272 = vsel %vm553, %v3271, %v3241
      %v3273 = vsel %vm555, %v3272, %v3245
      %v3274 = vsel %vm557, %v3273, %v3249
      %v3275 = vsel %vm559, %v3274, %v3253
      %v3276 = vsel %vm561, %v3275, %v3257
      %v3277 = vsel %vm563, %v3276, %v3261
      %3278 = vst.msk [vmem:[%s113 + $0x18] sm:$0xff] %vm565, %v3277
      %3280 = vrot.lane.b32.xlu0 %v3277, 32
      %v3281 = vpop.permute.xlu0 %3280
      %3283 = vst.msk [vmem:[%s113 + $0x18] sm:$0xff] %vm571, %v3281
      %v3284 = vld [vmem:[%s108] sm:$0xff]
      %v3285 = vlaneseq
      %v3286 = vshrl.u32 %v3285, 7
      %v3287 = vsub.s32 0, %v3286
      %v3288 = vrot.slane %v3284, %v3287
      %s3290 = sor.u32 256, 112
      %3291 = vbcast.lane.b32.xlu0 %v3288, %s3290
      %v3292 = vpop.permute.xlu0 %3291
      %s3294 = sor.u32 256, 120
      %3295 = vbcast.lane.b32.xlu0 %v3288, %s3294
      %v3296 = vpop.permute.xlu0 %3295
      %v3297 = vlaneseq
      %v3298 = vshrl.u32 %v3297, 7
      %v3299 = vsub.s32 1, %v3298
      %v3300 = vrot.slane %v3284, %v3299
      %s3302 = sor.u32 256, 112
      %3303 = vbcast.lane.b32.xlu0 %v3300, %s3302
      %v3304 = vpop.permute.xlu0 %3303
      %s3306 = sor.u32 256, 120
      %3307 = vbcast.lane.b32.xlu0 %v3300, %s3306
      %v3308 = vpop.permute.xlu0 %3307
      %v3309 = vlaneseq
      %v3310 = vshrl.u32 %v3309, 7
      %v3311 = vsub.s32 2, %v3310
      %v3312 = vrot.slane %v3284, %v3311
      %s3314 = sor.u32 256, 112
      %3315 = vbcast.lane.b32.xlu0 %v3312, %s3314
      %v3316 = vpop.permute.xlu0 %3315
      %s3318 = sor.u32 256, 120
      %3319 = vbcast.lane.b32.xlu0 %v3312, %s3318
      %v3320 = vpop.permute.xlu0 %3319
      %v3321 = vlaneseq
      %v3322 = vshrl.u32 %v3321, 7
      %v3323 = vsub.s32 3, %v3322
      %v3324 = vrot.slane %v3284, %v3323
      %s3326 = sor.u32 256, 112
      %3327 = vbcast.lane.b32.xlu0 %v3324, %s3326
      %v3328 = vpop.permute.xlu0 %3327
      %s3330 = sor.u32 256, 120
      %3331 = vbcast.lane.b32.xlu0 %v3324, %s3330
      %v3332 = vpop.permute.xlu0 %3331
      %v3333 = vlaneseq
      %v3334 = vshrl.u32 %v3333, 7
      %v3335 = vsub.s32 4, %v3334
      %v3336 = vrot.slane %v3284, %v3335
      %s3338 = sor.u32 256, 112
      %3339 = vbcast.lane.b32.xlu0 %v3336, %s3338
      %v3340 = vpop.permute.xlu0 %3339
      %s3342 = sor.u32 256, 120
      %3343 = vbcast.lane.b32.xlu0 %v3336, %s3342
      %v3344 = vpop.permute.xlu0 %3343
      %v3345 = vlaneseq
      %v3346 = vshrl.u32 %v3345, 7
      %v3347 = vsub.s32 5, %v3346
      %v3348 = vrot.slane %v3284, %v3347
      %s3350 = sor.u32 256, 112
      %3351 = vbcast.lane.b32.xlu0 %v3348, %s3350
      %v3352 = vpop.permute.xlu0 %3351
      %s3354 = sor.u32 256, 120
      %3355 = vbcast.lane.b32.xlu0 %v3348, %s3354
      %v3356 = vpop.permute.xlu0 %3355
      %v3357 = vlaneseq
      %v3358 = vshrl.u32 %v3357, 7
      %v3359 = vsub.s32 6, %v3358
      %v3360 = vrot.slane %v3284, %v3359
      %s3362 = sor.u32 256, 112
      %3363 = vbcast.lane.b32.xlu0 %v3360, %s3362
      %v3364 = vpop.permute.xlu0 %3363
      %s3366 = sor.u32 256, 120
      %3367 = vbcast.lane.b32.xlu0 %v3360, %s3366
      %v3368 = vpop.permute.xlu0 %3367
      %v3369 = vlaneseq
      %v3370 = vshrl.u32 %v3369, 7
      %v3371 = vsub.s32 7, %v3370
      %v3372 = vrot.slane %v3284, %v3371
      %s3374 = sor.u32 256, 112
      %3375 = vbcast.lane.b32.xlu0 %v3372, %s3374
      %v3376 = vpop.permute.xlu0 %3375
      %s3378 = sor.u32 256, 120
      %3379 = vbcast.lane.b32.xlu0 %v3372, %s3378
      %v3380 = vpop.permute.xlu0 %3379
      %v3381 = vcombine.low %v3292, %v3316
      %v3382 = vcombine.high %v3292, %v3316
      %v3384 = vunpack.c.l.s4 1983009808
      %v3385 = vunpack.c.0.s8 %v3384
      %v3386 = vlaneseq
      %v3387 = vshrl.u32 %v3386, 7
      %v3388 = vsub.s32 %v3385, %v3387
      %v3389 = vrot.slane %v3381, %v3388
      %v3391 = vunpack.c.l.s4 1983009808
      %v3392 = vunpack.c.0.s8 %v3391
      %v3393 = vlaneseq
      %v3394 = vshrl.u32 %v3393, 7
      %v3395 = vsub.s32 %v3392, %v3394
      %v3396 = vrot.slane %v3382, %v3395
      %v3397 = vcombine.low %v3304, %v3328
      %v3398 = vcombine.high %v3304, %v3328
      %v3400 = vunpack.c.l.s4 1983009808
      %v3401 = vunpack.c.0.s8 %v3400
      %v3402 = vlaneseq
      %v3403 = vshrl.u32 %v3402, 7
      %v3404 = vsub.s32 %v3401, %v3403
      %v3405 = vrot.slane %v3397, %v3404
      %v3407 = vunpack.c.l.s4 1983009808
      %v3408 = vunpack.c.0.s8 %v3407
      %v3409 = vlaneseq
      %v3410 = vshrl.u32 %v3409, 7
      %v3411 = vsub.s32 %v3408, %v3410
      %v3412 = vrot.slane %v3398, %v3411
      %v3413 = vcombine.low %v3340, %v3364
      %v3414 = vcombine.high %v3340, %v3364
      %v3416 = vunpack.c.l.s4 1983009808
      %v3417 = vunpack.c.0.s8 %v3416
      %v3418 = vlaneseq
      %v3419 = vshrl.u32 %v3418, 7
      %v3420 = vsub.s32 %v3417, %v3419
      %v3421 = vrot.slane %v3413, %v3420
      %v3423 = vunpack.c.l.s4 1983009808
      %v3424 = vunpack.c.0.s8 %v3423
      %v3425 = vlaneseq
      %v3426 = vshrl.u32 %v3425, 7
      %v3427 = vsub.s32 %v3424, %v3426
      %v3428 = vrot.slane %v3414, %v3427
      %v3429 = vcombine.low %v3352, %v3376
      %v3430 = vcombine.high %v3352, %v3376
      %v3432 = vunpack.c.l.s4 1983009808
      %v3433 = vunpack.c.0.s8 %v3432
      %v3434 = vlaneseq
      %v3435 = vshrl.u32 %v3434, 7
      %v3436 = vsub.s32 %v3433, %v3435
      %v3437 = vrot.slane %v3429, %v3436
      %v3439 = vunpack.c.l.s4 1983009808
      %v3440 = vunpack.c.0.s8 %v3439
      %v3441 = vlaneseq
      %v3442 = vshrl.u32 %v3441, 7
      %v3443 = vsub.s32 %v3440, %v3442
      %v3444 = vrot.slane %v3430, %v3443
      %v3445 = vcombine.low %v3389, %v3405
      %v3446 = vcombine.high %v3389, %v3405
      %v3448 = vunpack.c.l.s4 1934713408
      %v3449 = vunpack.c.0.s8 %v3448
      %v3450 = vlaneseq
      %v3451 = vshrl.u32 %v3450, 7
      %v3452 = vsub.s32 %v3449, %v3451
      %v3453 = vrot.slane %v3445, %v3452
      %v3455 = vunpack.c.l.s4 1934713408
      %v3456 = vunpack.c.0.s8 %v3455
      %v3457 = vlaneseq
      %v3458 = vshrl.u32 %v3457, 7
      %v3459 = vsub.s32 %v3456, %v3458
      %v3460 = vrot.slane %v3446, %v3459
      %v3461 = vcombine.low %v3396, %v3412
      %v3462 = vcombine.high %v3396, %v3412
      %v3464 = vunpack.c.l.s4 1934713408
      %v3465 = vunpack.c.0.s8 %v3464
      %v3466 = vlaneseq
      %v3467 = vshrl.u32 %v3466, 7
      %v3468 = vsub.s32 %v3465, %v3467
      %v3469 = vrot.slane %v3461, %v3468
      %v3471 = vunpack.c.l.s4 1934713408
      %v3472 = vunpack.c.0.s8 %v3471
      %v3473 = vlaneseq
      %v3474 = vshrl.u32 %v3473, 7
      %v3475 = vsub.s32 %v3472, %v3474
      %v3476 = vrot.slane %v3462, %v3475
      %v3477 = vcombine.low %v3421, %v3437
      %v3478 = vcombine.high %v3421, %v3437
      %v3480 = vunpack.c.l.s4 1934713408
      %v3481 = vunpack.c.0.s8 %v3480
      %v3482 = vlaneseq
      %v3483 = vshrl.u32 %v3482, 7
      %v3484 = vsub.s32 %v3481, %v3483
      %v3485 = vrot.slane %v3477, %v3484
      %v3487 = vunpack.c.l.s4 1934713408
      %v3488 = vunpack.c.0.s8 %v3487
      %v3489 = vlaneseq
      %v3490 = vshrl.u32 %v3489, 7
      %v3491 = vsub.s32 %v3488, %v3490
      %v3492 = vrot.slane %v3478, %v3491
      %v3493 = vcombine.low %v3428, %v3444
      %v3494 = vcombine.high %v3428, %v3444
      %v3496 = vunpack.c.l.s4 1934713408
      %v3497 = vunpack.c.0.s8 %v3496
      %v3498 = vlaneseq
      %v3499 = vshrl.u32 %v3498, 7
      %v3500 = vsub.s32 %v3497, %v3499
      %v3501 = vrot.slane %v3493, %v3500
      %v3503 = vunpack.c.l.s4 1934713408
      %v3504 = vunpack.c.0.s8 %v3503
      %v3505 = vlaneseq
      %v3506 = vshrl.u32 %v3505, 7
      %v3507 = vsub.s32 %v3504, %v3506
      %v3508 = vrot.slane %v3494, %v3507
      %v3509 = vcombine.low %v3453, %v3485
      %v3510 = vcombine.high %v3453, %v3485
      %v3511 = vcombine.low %v3460, %v3492
      %v3512 = vcombine.high %v3460, %v3492
      %v3513 = vcombine.low %v3469, %v3501
      %v3514 = vcombine.high %v3469, %v3501
      %v3515 = vcombine.low %v3476, %v3508
      %v3516 = vcombine.high %v3476, %v3508
      %v3517 = vcombine.low %v3296, %v3320
      %v3518 = vcombine.high %v3296, %v3320
      %v3520 = vunpack.c.l.s4 1983009808
      %v3521 = vunpack.c.0.s8 %v3520
      %v3522 = vlaneseq
      %v3523 = vshrl.u32 %v3522, 7
      %v3524 = vsub.s32 %v3521, %v3523
      %v3525 = vrot.slane %v3517, %v3524
      %v3527 = vunpack.c.l.s4 1983009808
      %v3528 = vunpack.c.0.s8 %v3527
      %v3529 = vlaneseq
      %v3530 = vshrl.u32 %v3529, 7
      %v3531 = vsub.s32 %v3528, %v3530
      %v3532 = vrot.slane %v3518, %v3531
      %v3533 = vcombine.low %v3308, %v3332
      %v3534 = vcombine.high %v3308, %v3332
      %v3536 = vunpack.c.l.s4 1983009808
      %v3537 = vunpack.c.0.s8 %v3536
      %v3538 = vlaneseq
      %v3539 = vshrl.u32 %v3538, 7
      %v3540 = vsub.s32 %v3537, %v3539
      %v3541 = vrot.slane %v3533, %v3540
      %v3543 = vunpack.c.l.s4 1983009808
      %v3544 = vunpack.c.0.s8 %v3543
      %v3545 = vlaneseq
      %v3546 = vshrl.u32 %v3545, 7
      %v3547 = vsub.s32 %v3544, %v3546
      %v3548 = vrot.slane %v3534, %v3547
      %v3549 = vcombine.low %v3344, %v3368
      %v3550 = vcombine.high %v3344, %v3368
      %v3552 = vunpack.c.l.s4 1983009808
      %v3553 = vunpack.c.0.s8 %v3552
      %v3554 = vlaneseq
      %v3555 = vshrl.u32 %v3554, 7
      %v3556 = vsub.s32 %v3553, %v3555
      %v3557 = vrot.slane %v3549, %v3556
      %v3559 = vunpack.c.l.s4 1983009808
      %v3560 = vunpack.c.0.s8 %v3559
      %v3561 = vlaneseq
      %v3562 = vshrl.u32 %v3561, 7
      %v3563 = vsub.s32 %v3560, %v3562
      %v3564 = vrot.slane %v3550, %v3563
      %v3565 = vcombine.low %v3356, %v3380
      %v3566 = vcombine.high %v3356, %v3380
      %v3568 = vunpack.c.l.s4 1983009808
      %v3569 = vunpack.c.0.s8 %v3568
      %v3570 = vlaneseq
      %v3571 = vshrl.u32 %v3570, 7
      %v3572 = vsub.s32 %v3569, %v3571
      %v3573 = vrot.slane %v3565, %v3572
      %v3575 = vunpack.c.l.s4 1983009808
      %v3576 = vunpack.c.0.s8 %v3575
      %v3577 = vlaneseq
      %v3578 = vshrl.u32 %v3577, 7
      %v3579 = vsub.s32 %v3576, %v3578
      %v3580 = vrot.slane %v3566, %v3579
      %v3581 = vcombine.low %v3525, %v3541
      %v3582 = vcombine.high %v3525, %v3541
      %v3584 = vunpack.c.l.s4 1934713408
      %v3585 = vunpack.c.0.s8 %v3584
      %v3586 = vlaneseq
      %v3587 = vshrl.u32 %v3586, 7
      %v3588 = vsub.s32 %v3585, %v3587
      %v3589 = vrot.slane %v3581, %v3588
      %v3591 = vunpack.c.l.s4 1934713408
      %v3592 = vunpack.c.0.s8 %v3591
      %v3593 = vlaneseq
      %v3594 = vshrl.u32 %v3593, 7
      %v3595 = vsub.s32 %v3592, %v3594
      %v3596 = vrot.slane %v3582, %v3595
      %v3597 = vcombine.low %v3532, %v3548
      %v3598 = vcombine.high %v3532, %v3548
      %v3600 = vunpack.c.l.s4 1934713408
      %v3601 = vunpack.c.0.s8 %v3600
      %v3602 = vlaneseq
      %v3603 = vshrl.u32 %v3602, 7
      %v3604 = vsub.s32 %v3601, %v3603
      %v3605 = vrot.slane %v3597, %v3604
      %v3607 = vunpack.c.l.s4 1934713408
      %v3608 = vunpack.c.0.s8 %v3607
      %v3609 = vlaneseq
      %v3610 = vshrl.u32 %v3609, 7
      %v3611 = vsub.s32 %v3608, %v3610
      %v3612 = vrot.slane %v3598, %v3611
      %v3613 = vcombine.low %v3557, %v3573
      %v3614 = vcombine.high %v3557, %v3573
      %v3616 = vunpack.c.l.s4 1934713408
      %v3617 = vunpack.c.0.s8 %v3616
      %v3618 = vlaneseq
      %v3619 = vshrl.u32 %v3618, 7
      %v3620 = vsub.s32 %v3617, %v3619
      %v3621 = vrot.slane %v3613, %v3620
      %v3623 = vunpack.c.l.s4 1934713408
      %v3624 = vunpack.c.0.s8 %v3623
      %v3625 = vlaneseq
      %v3626 = vshrl.u32 %v3625, 7
      %v3627 = vsub.s32 %v3624, %v3626
      %v3628 = vrot.slane %v3614, %v3627
      %v3629 = vcombine.low %v3564, %v3580
      %v3630 = vcombine.high %v3564, %v3580
      %v3632 = vunpack.c.l.s4 1934713408
      %v3633 = vunpack.c.0.s8 %v3632
      %v3634 = vlaneseq
      %v3635 = vshrl.u32 %v3634, 7
      %v3636 = vsub.s32 %v3633, %v3635
      %v3637 = vrot.slane %v3629, %v3636
      %v3639 = vunpack.c.l.s4 1934713408
      %v3640 = vunpack.c.0.s8 %v3639
      %v3641 = vlaneseq
      %v3642 = vshrl.u32 %v3641, 7
      %v3643 = vsub.s32 %v3640, %v3642
      %v3644 = vrot.slane %v3630, %v3643
      %v3645 = vcombine.low %v3589, %v3621
      %v3646 = vcombine.high %v3589, %v3621
      %v3647 = vcombine.low %v3596, %v3628
      %v3648 = vcombine.high %v3596, %v3628
      %v3649 = vcombine.low %v3605, %v3637
      %v3650 = vcombine.high %v3605, %v3637
      %v3651 = vcombine.low %v3612, %v3644
      %v3652 = vcombine.high %v3612, %v3644
      %3654 = vrot.lane.b32.xlu0 %v3510, 2
      %v3655 = vpop.permute.xlu0 %3654
      %3658 = vrot.lane.b32.xlu0 %v3511, 4
      %v3659 = vpop.permute.xlu0 %3658
      %3662 = vrot.lane.b32.xlu0 %v3512, 6
      %v3663 = vpop.permute.xlu0 %3662
      %3666 = vrot.lane.b32.xlu0 %v3513, 8
      %v3667 = vpop.permute.xlu0 %3666
      %3670 = vrot.lane.b32.xlu0 %v3514, 10
      %v3671 = vpop.permute.xlu0 %3670
      %3674 = vrot.lane.b32.xlu0 %v3515, 12
      %v3675 = vpop.permute.xlu0 %3674
      %3678 = vrot.lane.b32.xlu0 %v3516, 14
      %v3679 = vpop.permute.xlu0 %3678
      %3682 = vrot.lane.b32.xlu0 %v3645, 16
      %v3683 = vpop.permute.xlu0 %3682
      %3686 = vrot.lane.b32.xlu0 %v3646, 18
      %v3687 = vpop.permute.xlu0 %3686
      %3690 = vrot.lane.b32.xlu0 %v3647, 20
      %v3691 = vpop.permute.xlu0 %3690
      %3694 = vrot.lane.b32.xlu0 %v3648, 22
      %v3695 = vpop.permute.xlu0 %3694
      %3698 = vrot.lane.b32.xlu0 %v3649, 24
      %v3699 = vpop.permute.xlu0 %3698
      %3702 = vrot.lane.b32.xlu0 %v3650, 26
      %v3703 = vpop.permute.xlu0 %3702
      %3706 = vrot.lane.b32.xlu0 %v3651, 28
      %v3707 = vpop.permute.xlu0 %3706
      %3710 = vrot.lane.b32.xlu0 %v3652, 30
      %v3711 = vpop.permute.xlu0 %3710
      %v3713 = vsel %vm535, %v3509, %v3655
      %v3714 = vsel %vm537, %v3713, %v3659
      %v3715 = vsel %vm539, %v3714, %v3663
      %v3716 = vsel %vm541, %v3715, %v3667
      %v3717 = vsel %vm543, %v3716, %v3671
      %v3718 = vsel %vm545, %v3717, %v3675
      %v3719 = vsel %vm547, %v3718, %v3679
      %v3720 = vsel %vm549, %v3719, %v3683
      %v3721 = vsel %vm551, %v3720, %v3687
      %v3722 = vsel %vm553, %v3721, %v3691
      %v3723 = vsel %vm555, %v3722, %v3695
      %v3724 = vsel %vm557, %v3723, %v3699
      %v3725 = vsel %vm559, %v3724, %v3703
      %v3726 = vsel %vm561, %v3725, %v3707
      %v3727 = vsel %vm563, %v3726, %v3711
      %3729 = vrot.lane.b32.xlu0 %v3727, 64
      %v3730 = vpop.permute.xlu0 %3729
      %3732 = vst.msk [vmem:[%s113 + $0x18] sm:$0xff] %vm1021, %v3730
      %3733 = vrot.lane.b32.xlu0 %v3727, 96
      %v3734 = vpop.permute.xlu0 %3733
      %3736 = vst.msk [vmem:[%s113 + $0x18] sm:$0xff] %vm1026, %v3734
      %p3737 = scmp.lt.s32.totalorder %s12, 1
      %s3738 = scalar_select %p3737, %s12, 1
      %s3739 = smul.addr %s3738, 4
      %s3740 = smul.addr %s3739, 8
      %s3741 = scalar_lea.vmem %s1, %s3740
      // Predicated region
      $region25: #{run.1} parent=23 // pred_check
        %p3742 = pneg %p56
      $region26: #{run.1} parent=23 // pred_check_branch
        %3744 = sbr.rel (%p3742) target = $region28
      $region27: #{run.1} parent=23 // pred_region
        _
      $region28: #{run.1} parent=23 // pred_fallthru
        _
    $region24: #{run.1} parent=5 // pred_fallthru
      _
    %p3745 = scmp.le.s32.totalorder 2, %s7
    // Predicated region
    $region29: #{run.1} parent=5 // pred_check
      %p3746 = pneg %p3745
    $region30: #{run.1} parent=5 // pred_check_branch
      %3748 = sbr.rel (%p3746) target = $region32
    $region31: #{run.1} parent=5 // pred_region
      %s3749 = ssub.s32 %s7, 2
      // Predicated region
      $region33: #{run.1} parent=31 // pred_check
        %p3750 = pneg %p62
      $region34: #{run.1} parent=31 // pred_check_branch
        %3752 = sbr.rel (%p3750) target = $region36
      $region35: #{run.1} parent=31 // pred_region
        %p3753 = scmp.lt.s32.totalorder %s13, 1
        %s3754 = scalar_select %p3753, %s13, 1
        %s3755 = smul.addr %s3754, 4
        %s3756 = smul.addr %s3755, 8
        %s3757 = scalar_lea.vmem %s1, %s3756
      $region36: #{run.1} parent=31 // pred_fallthru
        _
    $region32: #{run.1} parent=5 // pred_fallthru
      _
  $region6: #{run.1} parent=0 // loop_footer
    %s11 = sadd.s32 1, %s7
  $region7: #{run.1} parent=0 // loop_footer_branch
    %6 = sbr.rel target = $region3
  $region8: #{run.1} parent=0 // loop_exit
    _

</llo_original>
